<compile_context>
chip_gen: v6e
topology: v6e:2x2x1
jax: 0.10.0
libtpu: 0.0.40
codegen_flags: <defaults>
</compile_context>

<pallas_src>
import functools

import jax
import jax.numpy as jnp
import numpy as np
from jax import lax
from jax.experimental import pallas as pl
from jax.experimental.pallas import tpu as pltpu

# ---- hyperparameters (hp.*) ----
VOCAB_SIZE = 64
EMBED_DIM = 32
HIDDEN_DIM = 32
TARGET_DIM = 8
BATCH = 2
SEQ = 8

SUBLANE = 8    # f32 sublane tile
LANES = 128    # vreg lane width


def _lstm_res_head_kernel(x_ref,     # [(T+1)*BP, E] f32  embedded tokens (time-major, batch+time padded)
                          w1i_ref,   # [E, 4H]   bf16  lstm_1 input weights
                          b1_ref,    # [1, 4H]   f32   lstm_1 bias (b_ih + b_hh)
                          wrec_ref,  # [4H, 8H]  bf16  [[W2i;W2h;0;0] | [W1h;0;0;0]]
                          b2_ref,    # [1, 4H]   f32   lstm_2 bias
                          wo_ref,    # [4H, 128] f32   rows [0,H) and [H,2H) = wo (cols [0,D))
                          bo_ref,    # [1, 128]  f32   output bias, lane-padded
                          out_ref,   # [T*BP, 128] f32 sigmoid((l1+l2)@wo + bo) in lanes [0,D)
                          xw1_ref,   # VMEM scratch [(T+1)*BP, 4H] f32
                          slab_ref,  # VMEM scratch [T*BP, 4H] f32  [l1[t] | l2[t] | junk]
                          *, bp):
    h4 = wrec_ref.shape[0]           # 4H = 128
    h = h4 // 4
    t_steps = slab_ref.shape[0] // bp

    # ---- hoisted, non-recurrent work (off the serial critical path) ----
    w_rec = wrec_ref[...]                                    # bf16, 16 resident vregs
    b2 = jnp.broadcast_to(b2_ref[...], (bp, h4))
    lane = lax.broadcasted_iota(jnp.int32, (bp, h4), 1)
    first_block = lane < h                                   # lanes [0, H)

    # layer-1 input projection for every (padded) timestep in one MXU call
    xw1_ref[...] = (
        jnp.dot(x_ref[...].astype(jnp.bfloat16), w1i_ref[...],
                preferred_element_type=jnp.float32)
        + b1_ref[...])

    def cell(gates, c_full, tgt):
        """LSTM cell on full [BP,4H] vregs; gate lane layout [i | f | g | o].

        New c/h are valid in lane block `tgt`; other lanes carry bounded
        don't-care values killed downstream by zero weight rows / Wo_pack.
        """
        sg = jax.nn.sigmoid(gates)   # i, f, o blocks (full-vreg EUP pass)
        th = jnp.tanh(gates)         # g block       (full-vreg EUP pass)

        def align(v, k):             # move gate block k -> block tgt (XLU roll)
            s = ((tgt - k) % 4) * h
            return v if s == 0 else pltpu.roll(v, s, axis=1)

        c_new = align(sg, 1) * c_full + align(sg, 0) * align(th, 2)
        h_new = align(sg, 3) * jnp.tanh(c_new)
        return h_new, c_new

    # ---- prologue: layer-1 cell at t=0 (zero init state -> g1[0] = xw1[0]) ----
    zeros = jnp.zeros((bp, h4), jnp.float32)
    h1, c1 = cell(xw1_ref[pl.ds(0, bp), :], zeros, tgt=0)

    # ---- recurrence: ONE MXU push + full-vreg elementwise per timestep ----
    # TODO(synk): on v7x, stage w_rec once via pltpu.matmul_push_rhs and use the
    # MRB for in-place accumulation instead of jnp.dot (v7x-only follow-up).
    def step(t, carry):
        h1, c1, h2, c2 = carry       # at entry: h1[t], c1[t], h2[t-1], c2[t-1]
        row = pl.multiple_of(t * bp, bp)
        row_n = pl.multiple_of((t + 1) * bp, bp)

        # merged push: lanes [0,4H) -> g2[t] (pre-bias); lanes [4H,8H) -> h1[t]@W1h
        hh = jnp.where(first_block, h1, h2)
        merged = jnp.dot(hh.astype(jnp.bfloat16), w_rec,
                         preferred_element_type=jnp.float32)

        g2 = merged[:, :h4] + b2
        h2, c2 = cell(g2, c2, tgt=1)

        # one lane-dense full-vreg store per step: block 0 = l1[t], block 1 = l2[t]
        slab_ref[pl.ds(row, bp), :] = jnp.where(first_block, h1, h2)

        # layer-1 cell for step t+1 (last iteration reads the zero-padded xw1
        # row block; its result is bounded and never used)
        g1n = merged[:, h4:] + xw1_ref[pl.ds(row_n, bp), :]
        h1, c1 = cell(g1n, c1, tgt=0)
        return h1, c1, h2, c2

    lax.fori_loop(0, t_steps, step, (h1, c1, zeros, zeros), unroll=True)

    # ---- epilogue (off the recurrent chain): residual + Linear + sigmoid ----
    # slab @ Wo_pack == (l1 + l2) @ wo because Wo_pack repeats wo in rows
    # [0,H) and [H,2H) and is zero elsewhere (kills junk lanes).
    head = (jnp.dot(slab_ref[...], wo_ref[...],
                    preferred_element_type=jnp.float32)
            + bo_ref[...])
    out_ref[...] = jax.nn.sigmoid(head)


@jax.jit
def lstm_res_head_forward(tokens, params):
    """tokens: int32 [B, T] -> float32 [B, T, TARGET_DIM]."""
    B, T = tokens.shape
    H, E, D, H4 = HIDDEN_DIM, EMBED_DIM, TARGET_DIM, 4 * HIDDEN_DIM
    BP = max(SUBLANE, ((B + SUBLANE - 1) // SUBLANE) * SUBLANE)

    # Embedding lookup (gather) is glue and stays in plain JAX.
    # TODO(synk): the reference module calls self.embed_data twice; the second
    # call on a float tensor is a bug in the PyTorch code, so we embed once.
    emb = params["embedding"][tokens].astype(jnp.float32)        # [B, T, E]
    x = jnp.transpose(emb, (1, 0, 2))                            # [T, B, E] time-major
    # pad batch -> sublane tile, plus one trailing zero timestep for the loop's
    # speculative cell1(t+1) read on the final iteration
    x = jnp.pad(x, ((0, 1), (0, BP - B), (0, 0)))
    x2d = x.reshape((T + 1) * BP, E)

    # Pack recurrent weights so each timestep is ONE [BP,4H]@[4H,8H] MXU push:
    #   lanes [0,4H):  hh @ [W2i; W2h; 0; 0]  = g2[t] (pre-bias)
    #   lanes [4H,8H): hh @ [W1h;  0 ; 0; 0]  = recurrent part of g1[t+1]
    zeros_h = jnp.zeros((H, H4), jnp.float32)
    w2_pack = jnp.concatenate([params["w2i"], params["w2h"], zeros_h, zeros_h], axis=0)
    w1h_pad = jnp.concatenate([params["w1h"], zeros_h, zeros_h, zeros_h], axis=0)
    w_rec = jnp.concatenate([w2_pack, w1h_pad], axis=1).astype(jnp.bfloat16)  # [4H, 8H]
    w1i_bf16 = params["w1i"].astype(jnp.bfloat16)

    # Output head packed so slab @ Wo_pack == (l1 + l2) @ wo; D lanes padded to
    # 128 so the kernel's final store stays a full-vreg unmasked vst.
    wo_pack = jnp.zeros((H4, LANES), jnp.float32)
    wo_pack = wo_pack.at[:H, :D].set(params["wo"]).at[H:2 * H, :D].set(params["wo"])
    bo_pad = jnp.zeros((1, LANES), jnp.float32).at[:, :D].set(params["bo"])

    flops = (2 * (T + 1) * BP * E * H4            # xw1 projection
             + T * 2 * BP * H4 * (2 * H4)         # merged recurrent matmuls
             + 2 * T * BP * H4 * LANES)           # output head
    transcendentals = (2 * T + 1) * 3 * BP * H4 + T * BP * LANES
    bytes_accessed = (4 * ((T + 1) * BP * E + H4 * LANES + 2 * H4 + 2 * LANES
                           + T * BP * LANES)
                      + 2 * (E * H4 + H4 * 2 * H4))

    # No grid: ~0.3 MiB working set fits VMEM on all generations; the workload
    # is a single serial recurrence (add a "parallel" batch axis only if B > 8).
    vmem = pl.BlockSpec(memory_space=pltpu.MemorySpace.VMEM)
    out2d = pl.pallas_call(
        functools.partial(_lstm_res_head_kernel, bp=BP),
        out_shape=jax.ShapeDtypeStruct((T * BP, LANES), jnp.float32),
        in_specs=[vmem] * 7,
        out_specs=vmem,
        scratch_shapes=[pltpu.VMEM(((T + 1) * BP, H4), jnp.float32),
                        pltpu.VMEM((T * BP, H4), jnp.float32)],
        cost_estimate=pl.CostEstimate(flops=flops,
                                      transcendentals=transcendentals,
                                      bytes_accessed=bytes_accessed),
    )(x2d, w1i_bf16, params["b1"], w_rec, params["b2"], wo_pack, bo_pad)

    out = out2d.reshape(T, BP, LANES)[:, :B, :D]                 # [T, B, D]
    return jnp.transpose(out, (1, 0, 2))                         # [B, T, D]


def init_params(key):
    ks = jax.random.split(key, 9)
    H4 = 4 * HIDDEN_DIM
    scale = 1.0 / np.sqrt(HIDDEN_DIM)

    def u(k, shape):
        return jax.random.uniform(k, shape, jnp.float32, -scale, scale)

    return {
        "embedding": u(ks[0], (VOCAB_SIZE, EMBED_DIM)),
        # PyTorch LSTM weights are [4H, in]; store transposed [in, 4H].
        # b = b_ih + b_hh collapsed into one bias, kept as [1, 4H] for 2D layout.
        "w1i": u(ks[1], (EMBED_DIM, H4)),
        "w1h": u(ks[2], (HIDDEN_DIM, H4)),
        "b1": u(ks[3], (1, H4)),
        "w2i": u(ks[4], (HIDDEN_DIM, H4)),
        "w2h": u(ks[5], (HIDDEN_DIM, H4)),
        "b2": u(ks[6], (1, H4)),
        # nn.Linear weight is [D, H]; store transposed [H, D].
        "wo": u(ks[7], (HIDDEN_DIM, TARGET_DIM)),
        "bo": u(ks[8], (1, TARGET_DIM)),
    }


def ref_forward(tokens, p):
    """Pure-JAX f32 reference mirroring PyTorch semantics (gate order i,f,g,o)."""
    H = HIDDEN_DIM
    emb = p["embedding"][tokens].astype(jnp.float32)             # [B, T, E]
    B = emb.shape[0]

    def run_lstm(x_btE, wi, wh, b):
        def step(carry, x_t):
            hh, cc = carry
            g = x_t @ wi + hh @ wh + b
            i = jax.nn.sigmoid(g[:, :H])
            f = jax.nn.sigmoid(g[:, H:2 * H])
            gg = jnp.tanh(g[:, 2 * H:3 * H])
            o = jax.nn.sigmoid(g[:, 3 * H:])
            cc = f * cc + i * gg
            hh = o * jnp.tanh(cc)
            return (hh, cc), hh
        x_tbE = jnp.transpose(x_btE, (1, 0, 2))
        init = (jnp.zeros((B, H), jnp.float32), jnp.zeros((B, H), jnp.float32))
        _, hs = lax.scan(step, init, x_tbE)
        return jnp.transpose(hs, (1, 0, 2))

    l1 = run_lstm(emb, p["w1i"], p["w1h"], p["b1"][0])
    l2 = run_lstm(l1, p["w2i"], p["w2h"], p["b2"][0])
    return jax.nn.sigmoid((l1 + l2) @ p["wo"] + p["bo"][0])


if __name__ == "__main__":
    key = jax.random.PRNGKey(0)
    k_tok, k_par = jax.random.split(key)
    params = init_params(k_par)
    tokens = jax.random.randint(k_tok, (BATCH, SEQ), 0, VOCAB_SIZE, dtype=jnp.int32)

    out = jax.block_until_ready(lstm_res_head_forward(tokens, params))
    ref = jax.block_until_ready(ref_forward(tokens, params))

    assert out.shape == (BATCH, SEQ, TARGET_DIM), out.shape
    # bf16 MXU operands (f32 accumulation) -> relaxed tolerance vs f32 reference.
    np.testing.assert_allclose(np.asarray(out), np.asarray(ref), rtol=2e-2, atol=2e-2)
    print("KERNEL_OK")
</pallas_src>

<mosaic_0001>
module attributes {stable_mosaic.version = 11 : i64} {
  func.func @_lstm_res_head_kernel(%arg0: memref<72x32xf32, #tpu.memory_space<vmem>>, %arg1: memref<32x128xbf16, #tpu.memory_space<vmem>>, %arg2: memref<1x128xf32, #tpu.memory_space<vmem>>, %arg3: memref<128x256xbf16, #tpu.memory_space<vmem>>, %arg4: memref<1x128xf32, #tpu.memory_space<vmem>>, %arg5: memref<128x128xf32, #tpu.memory_space<vmem>>, %arg6: memref<1x128xf32, #tpu.memory_space<vmem>>, %arg7: memref<64x128xf32, #tpu.memory_space<vmem>>, %arg8: memref<72x128xf32, #tpu.memory_space<vmem>>, %arg9: memref<64x128xf32, #tpu.memory_space<vmem>>) attributes {dimension_semantics = [], scalar_prefetch = 0 : i64, scratch_operands = 2 : i64, tpu.core_type = #tpu.core_type<tc>} {
    %c0 = arith.constant 0 : index
    %c0_0 = arith.constant 0 : index
    %0 = vector.load %arg3[%c0, %c0_0] : memref<128x256xbf16, #tpu.memory_space<vmem>>, vector<128x256xbf16>
    %c0_1 = arith.constant 0 : index
    %c0_2 = arith.constant 0 : index
    %1 = vector.load %arg4[%c0_1, %c0_2] : memref<1x128xf32, #tpu.memory_space<vmem>>, vector<1x128xf32>
    %2 = vector.shape_cast %1 : vector<1x128xf32> to vector<1x128xf32>
    %3 = vector.broadcast %2 : vector<1x128xf32> to vector<8x128xf32>
    %4 = tpu.iota {dimensions = array<i32: 1>} : vector<8x128xi32>
    %c32_i32 = arith.constant 32 : i32
    %5 = vector.broadcast %c32_i32 : i32 to vector<8x128xi32>
    %6 = arith.cmpi slt, %4, %5 : vector<8x128xi32>
    %c0_3 = arith.constant 0 : index
    %c0_4 = arith.constant 0 : index
    %7 = vector.load %arg0[%c0_3, %c0_4] : memref<72x32xf32, #tpu.memory_space<vmem>>, vector<72x32xf32>
    %8 = arith.truncf %7 : vector<72x32xf32> to vector<72x32xbf16>
    %c0_5 = arith.constant 0 : index
    %c0_6 = arith.constant 0 : index
    %9 = vector.load %arg1[%c0_5, %c0_6] : memref<32x128xbf16, #tpu.memory_space<vmem>>, vector<32x128xbf16>
    %cst = arith.constant dense<0.000000e+00> : vector<72x128xf32>
    %10 = tpu.matmul %8, %9, %cst {dimension_numbers = #tpu.dot_dimension_numbers<[1], [0], [0], [1], [0, 0, 1, 1], [], []>} : vector<72x32xbf16>, vector<32x128xbf16>, vector<72x128xf32> -> vector<72x128xf32>
    %c0_7 = arith.constant 0 : index
    %c0_8 = arith.constant 0 : index
    %11 = vector.load %arg2[%c0_7, %c0_8] : memref<1x128xf32, #tpu.memory_space<vmem>>, vector<1x128xf32>
    %12 = vector.broadcast %11 : vector<1x128xf32> to vector<72x128xf32>
    %13 = arith.addf %10, %12 : vector<72x128xf32>
    %c0_9 = arith.constant 0 : index
    %c0_10 = arith.constant 0 : index
    %14 = vector.load %arg8[%c0_9, %c0_10] : memref<72x128xf32, #tpu.memory_space<vmem>>, vector<72x128xf32>
    tpu.vector_store %arg8[%c0_9, %c0_10], %13 {strides = array<i32>} : memref<72x128xf32, #tpu.memory_space<vmem>>, vector<72x128xf32>,
    %cst_11 = arith.constant 0.000000e+00 : f32
    %15 = vector.broadcast %cst_11 : f32 to vector<8x128xf32>
    %c0_12 = arith.constant 0 : index
    %c0_13 = arith.constant 0 : index
    %16 = vector.load %arg8[%c0_12, %c0_13] : memref<72x128xf32, #tpu.memory_space<vmem>>, vector<8x128xf32>
    %17 = arith.negf %16 : vector<8x128xf32>
    %18 = math.exp %17 : vector<8x128xf32>
    %cst_14 = arith.constant 1.000000e+00 : f32
    %19 = vector.broadcast %cst_14 : f32 to vector<8x128xf32>
    %20 = arith.addf %19, %18 : vector<8x128xf32>
    %21 = arith.divf %19, %20 : vector<8x128xf32>
    %22 = math.tanh %16 : vector<8x128xf32>
    %c96_i32 = arith.constant 96 : i32
    %23 = tpu.dynamic_rotate %21 by %c96_i32 dim 1 : vector<8x128xf32>, i32 -> vector<8x128xf32>
    %24 = arith.mulf %23, %15 : vector<8x128xf32>
    %c64_i32 = arith.constant 64 : i32
    %25 = tpu.dynamic_rotate %22 by %c64_i32 dim 1 : vector<8x128xf32>, i32 -> vector<8x128xf32>
    %26 = arith.mulf %21, %25 : vector<8x128xf32>
    %27 = arith.addf %24, %26 : vector<8x128xf32>
    %c32_i32_15 = arith.constant 32 : i32
    %28 = tpu.dynamic_rotate %21 by %c32_i32_15 dim 1 : vector<8x128xf32>, i32 -> vector<8x128xf32>
    %29 = math.tanh %27 : vector<8x128xf32>
    %30 = arith.mulf %28, %29 : vector<8x128xf32>
    %c0_i32 = arith.constant 0 : i32
    %c8_i32 = arith.constant 8 : i32
    %31 = arith.muli %c0_i32, %c8_i32 : i32
    %32 = tpu.assume_multiple %31, 8 : i32
    %c1_i32 = arith.constant 1 : i32
    %33 = arith.addi %c0_i32, %c1_i32 : i32
    %c8_i32_16 = arith.constant 8 : i32
    %34 = arith.muli %33, %c8_i32_16 : i32
    %35 = tpu.assume_multiple %34, 8 : i32
    %36 = arith.select %6, %30, %15 : vector<8x128xi1>, vector<8x128xf32>
    %37 = arith.truncf %36 : vector<8x128xf32> to vector<8x128xbf16>
    %cst_17 = arith.constant dense<0.000000e+00> : vector<8x256xf32>
    %38 = tpu.matmul %37, %0, %cst_17 {dimension_numbers = #tpu.dot_dimension_numbers<[1], [0], [0], [1], [0, 0, 1, 1], [], []>} : vector<8x128xbf16>, vector<128x256xbf16>, vector<8x256xf32> -> vector<8x256xf32>
    %39 = vector.extract_strided_slice %38 {offsets = [0, 0], sizes = [8, 128], strides = [1, 1]} : vector<8x256xf32> to vector<8x128xf32>
    %40 = arith.addf %39, %3 : vector<8x128xf32>
    %41 = arith.negf %40 : vector<8x128xf32>
    %42 = math.exp %41 : vector<8x128xf32>
    %cst_18 = arith.constant 1.000000e+00 : f32
    %43 = vector.broadcast %cst_18 : f32 to vector<8x128xf32>
    %44 = arith.addf %43, %42 : vector<8x128xf32>
    %45 = arith.divf %43, %44 : vector<8x128xf32>
    %46 = math.tanh %40 : vector<8x128xf32>
    %47 = arith.mulf %45, %15 : vector<8x128xf32>
    %c32_i32_19 = arith.constant 32 : i32
    %48 = tpu.dynamic_rotate %45 by %c32_i32_19 dim 1 : vector<8x128xf32>, i32 -> vector<8x128xf32>
    %c96_i32_20 = arith.constant 96 : i32
    %49 = tpu.dynamic_rotate %46 by %c96_i32_20 dim 1 : vector<8x128xf32>, i32 -> vector<8x128xf32>
    %50 = arith.mulf %48, %49 : vector<8x128xf32>
    %51 = arith.addf %47, %50 : vector<8x128xf32>
    %c64_i32_21 = arith.constant 64 : i32
    %52 = tpu.dynamic_rotate %45 by %c64_i32_21 dim 1 : vector<8x128xf32>, i32 -> vector<8x128xf32>
    %53 = math.tanh %51 : vector<8x128xf32>
    %54 = arith.mulf %52, %53 : vector<8x128xf32>
    %55 = arith.select %6, %30, %54 : vector<8x128xi1>, vector<8x128xf32>
    %56 = arith.index_cast %32 : i32 to index
    %c0_22 = arith.constant 0 : index
    %57 = vector.load %arg9[%56, %c0_22] : memref<64x128xf32, #tpu.memory_space<vmem>>, vector<8x128xf32>
    tpu.vector_store %arg9[%56, %c0_22], %55 {strides = array<i32>} : memref<64x128xf32, #tpu.memory_space<vmem>>, vector<8x128xf32>,
    %58 = vector.extract_strided_slice %38 {offsets = [0, 128], sizes = [8, 128], strides = [1, 1]} : vector<8x256xf32> to vector<8x128xf32>
    %59 = arith.index_cast %35 : i32 to index
    %c0_23 = arith.constant 0 : index
    %60 = vector.load %arg8[%59, %c0_23] : memref<72x128xf32, #tpu.memory_space<vmem>>, vector<8x128xf32>
    %61 = arith.addf %58, %60 : vector<8x128xf32>
    %62 = arith.negf %61 : vector<8x128xf32>
    %63 = math.exp %62 : vector<8x128xf32>
    %cst_24 = arith.constant 1.000000e+00 : f32
    %64 = vector.broadcast %cst_24 : f32 to vector<8x128xf32>
    %65 = arith.addf %64, %63 : vector<8x128xf32>
    %66 = arith.divf %64, %65 : vector<8x128xf32>
    %67 = math.tanh %61 : vector<8x128xf32>
    %c96_i32_25 = arith.constant 96 : i32
    %68 = tpu.dynamic_rotate %66 by %c96_i32_25 dim 1 : vector<8x128xf32>, i32 -> vector<8x128xf32>
    %69 = arith.mulf %68, %27 : vector<8x128xf32>
    %c64_i32_26 = arith.constant 64 : i32
    %70 = tpu.dynamic_rotate %67 by %c64_i32_26 dim 1 : vector<8x128xf32>, i32 -> vector<8x128xf32>
    %71 = arith.mulf %66, %70 : vector<8x128xf32>
    %72 = arith.addf %69, %71 : vector<8x128xf32>
    %c32_i32_27 = arith.constant 32 : i32
    %73 = tpu.dynamic_rotate %66 by %c32_i32_27 dim 1 : vector<8x128xf32>, i32 -> vector<8x128xf32>
    %74 = math.tanh %72 : vector<8x128xf32>
    %75 = arith.mulf %73, %74 : vector<8x128xf32>
    %c1_i32_28 = arith.constant 1 : i32
    %c8_i32_29 = arith.constant 8 : i32
    %76 = arith.muli %c1_i32_28, %c8_i32_29 : i32
    %77 = tpu.assume_multiple %76, 8 : i32
    %c1_i32_30 = arith.constant 1 : i32
    %78 = arith.addi %c1_i32_28, %c1_i32_30 : i32
    %c8_i32_31 = arith.constant 8 : i32
    %79 = arith.muli %78, %c8_i32_31 : i32
    %80 = tpu.assume_multiple %79, 8 : i32
    %81 = arith.select %6, %75, %54 : vector<8x128xi1>, vector<8x128xf32>
    %82 = arith.truncf %81 : vector<8x128xf32> to vector<8x128xbf16>
    %cst_32 = arith.constant dense<0.000000e+00> : vector<8x256xf32>
    %83 = tpu.matmul %82, %0, %cst_32 {dimension_numbers = #tpu.dot_dimension_numbers<[1], [0], [0], [1], [0, 0, 1, 1], [], []>} : vector<8x128xbf16>, vector<128x256xbf16>, vector<8x256xf32> -> vector<8x256xf32>
    %84 = vector.extract_strided_slice %83 {offsets = [0, 0], sizes = [8, 128], strides = [1, 1]} : vector<8x256xf32> to vector<8x128xf32>
    %85 = arith.addf %84, %3 : vector<8x128xf32>
    %86 = arith.negf %85 : vector<8x128xf32>
    %87 = math.exp %86 : vector<8x128xf32>
    %cst_33 = arith.constant 1.000000e+00 : f32
    %88 = vector.broadcast %cst_33 : f32 to vector<8x128xf32>
    %89 = arith.addf %88, %87 : vector<8x128xf32>
    %90 = arith.divf %88, %89 : vector<8x128xf32>
    %91 = math.tanh %85 : vector<8x128xf32>
    %92 = arith.mulf %90, %51 : vector<8x128xf32>
    %c32_i32_34 = arith.constant 32 : i32
    %93 = tpu.dynamic_rotate %90 by %c32_i32_34 dim 1 : vector<8x128xf32>, i32 -> vector<8x128xf32>
    %c96_i32_35 = arith.constant 96 : i32
    %94 = tpu.dynamic_rotate %91 by %c96_i32_35 dim 1 : vector<8x128xf32>, i32 -> vector<8x128xf32>
    %95 = arith.mulf %93, %94 : vector<8x128xf32>
    %96 = arith.addf %92, %95 : vector<8x128xf32>
    %c64_i32_36 = arith.constant 64 : i32
    %97 = tpu.dynamic_rotate %90 by %c64_i32_36 dim 1 : vector<8x128xf32>, i32 -> vector<8x128xf32>
    %98 = math.tanh %96 : vector<8x128xf32>
    %99 = arith.mulf %97, %98 : vector<8x128xf32>
    %100 = arith.select %6, %75, %99 : vector<8x128xi1>, vector<8x128xf32>
    %101 = arith.index_cast %77 : i32 to index
    %c0_37 = arith.constant 0 : index
    %102 = vector.load %arg9[%101, %c0_37] : memref<64x128xf32, #tpu.memory_space<vmem>>, vector<8x128xf32>
    tpu.vector_store %arg9[%101, %c0_37], %100 {strides = array<i32>} : memref<64x128xf32, #tpu.memory_space<vmem>>, vector<8x128xf32>,
    %103 = vector.extract_strided_slice %83 {offsets = [0, 128], sizes = [8, 128], strides = [1, 1]} : vector<8x256xf32> to vector<8x128xf32>
    %104 = arith.index_cast %80 : i32 to index
    %c0_38 = arith.constant 0 : index
    %105 = vector.load %arg8[%104, %c0_38] : memref<72x128xf32, #tpu.memory_space<vmem>>, vector<8x128xf32>
    %106 = arith.addf %103, %105 : vector<8x128xf32>
    %107 = arith.negf %106 : vector<8x128xf32>
    %108 = math.exp %107 : vector<8x128xf32>
    %cst_39 = arith.constant 1.000000e+00 : f32
    %109 = vector.broadcast %cst_39 : f32 to vector<8x128xf32>
    %110 = arith.addf %109, %108 : vector<8x128xf32>
    %111 = arith.divf %109, %110 : vector<8x128xf32>
    %112 = math.tanh %106 : vector<8x128xf32>
    %c96_i32_40 = arith.constant 96 : i32
    %113 = tpu.dynamic_rotate %111 by %c96_i32_40 dim 1 : vector<8x128xf32>, i32 -> vector<8x128xf32>
    %114 = arith.mulf %113, %72 : vector<8x128xf32>
    %c64_i32_41 = arith.constant 64 : i32
    %115 = tpu.dynamic_rotate %112 by %c64_i32_41 dim 1 : vector<8x128xf32>, i32 -> vector<8x128xf32>
    %116 = arith.mulf %111, %115 : vector<8x128xf32>
    %117 = arith.addf %114, %116 : vector<8x128xf32>
    %c32_i32_42 = arith.constant 32 : i32
    %118 = tpu.dynamic_rotate %111 by %c32_i32_42 dim 1 : vector<8x128xf32>, i32 -> vector<8x128xf32>
    %119 = math.tanh %117 : vector<8x128xf32>
    %120 = arith.mulf %118, %119 : vector<8x128xf32>
    %c2_i32 = arith.constant 2 : i32
    %c8_i32_43 = arith.constant 8 : i32
    %121 = arith.muli %c2_i32, %c8_i32_43 : i32
    %122 = tpu.assume_multiple %121, 8 : i32
    %c1_i32_44 = arith.constant 1 : i32
    %123 = arith.addi %c2_i32, %c1_i32_44 : i32
    %c8_i32_45 = arith.constant 8 : i32
    %124 = arith.muli %123, %c8_i32_45 : i32
    %125 = tpu.assume_multiple %124, 8 : i32
    %126 = arith.select %6, %120, %99 : vector<8x128xi1>, vector<8x128xf32>
    %127 = arith.truncf %126 : vector<8x128xf32> to vector<8x128xbf16>
    %cst_46 = arith.constant dense<0.000000e+00> : vector<8x256xf32>
    %128 = tpu.matmul %127, %0, %cst_46 {dimension_numbers = #tpu.dot_dimension_numbers<[1], [0], [0], [1], [0, 0, 1, 1], [], []>} : vector<8x128xbf16>, vector<128x256xbf16>, vector<8x256xf32> -> vector<8x256xf32>
    %129 = vector.extract_strided_slice %128 {offsets = [0, 0], sizes = [8, 128], strides = [1, 1]} : vector<8x256xf32> to vector<8x128xf32>
    %130 = arith.addf %129, %3 : vector<8x128xf32>
    %131 = arith.negf %130 : vector<8x128xf32>
    %132 = math.exp %131 : vector<8x128xf32>
    %cst_47 = arith.constant 1.000000e+00 : f32
    %133 = vector.broadcast %cst_47 : f32 to vector<8x128xf32>
    %134 = arith.addf %133, %132 : vector<8x128xf32>
    %135 = arith.divf %133, %134 : vector<8x128xf32>
    %136 = math.tanh %130 : vector<8x128xf32>
    %137 = arith.mulf %135, %96 : vector<8x128xf32>
    %c32_i32_48 = arith.constant 32 : i32
    %138 = tpu.dynamic_rotate %135 by %c32_i32_48 dim 1 : vector<8x128xf32>, i32 -> vector<8x128xf32>
    %c96_i32_49 = arith.constant 96 : i32
    %139 = tpu.dynamic_rotate %136 by %c96_i32_49 dim 1 : vector<8x128xf32>, i32 -> vector<8x128xf32>
    %140 = arith.mulf %138, %139 : vector<8x128xf32>
    %141 = arith.addf %137, %140 : vector<8x128xf32>
    %c64_i32_50 = arith.constant 64 : i32
    %142 = tpu.dynamic_rotate %135 by %c64_i32_50 dim 1 : vector<8x128xf32>, i32 -> vector<8x128xf32>
    %143 = math.tanh %141 : vector<8x128xf32>
    %144 = arith.mulf %142, %143 : vector<8x128xf32>
    %145 = arith.select %6, %120, %144 : vector<8x128xi1>, vector<8x128xf32>
    %146 = arith.index_cast %122 : i32 to index
    %c0_51 = arith.constant 0 : index
    %147 = vector.load %arg9[%146, %c0_51] : memref<64x128xf32, #tpu.memory_space<vmem>>, vector<8x128xf32>
    tpu.vector_store %arg9[%146, %c0_51], %145 {strides = array<i32>} : memref<64x128xf32, #tpu.memory_space<vmem>>, vector<8x128xf32>,
    %148 = vector.extract_strided_slice %128 {offsets = [0, 128], sizes = [8, 128], strides = [1, 1]} : vector<8x256xf32> to vector<8x128xf32>
    %149 = arith.index_cast %125 : i32 to index
    %c0_52 = arith.constant 0 : index
    %150 = vector.load %arg8[%149, %c0_52] : memref<72x128xf32, #tpu.memory_space<vmem>>, vector<8x128xf32>
    %151 = arith.addf %148, %150 : vector<8x128xf32>
    %152 = arith.negf %151 : vector<8x128xf32>
    %153 = math.exp %152 : vector<8x128xf32>
    %cst_53 = arith.constant 1.000000e+00 : f32
    %154 = vector.broadcast %cst_53 : f32 to vector<8x128xf32>
    %155 = arith.addf %154, %153 : vector<8x128xf32>
    %156 = arith.divf %154, %155 : vector<8x128xf32>
    %157 = math.tanh %151 : vector<8x128xf32>
    %c96_i32_54 = arith.constant 96 : i32
    %158 = tpu.dynamic_rotate %156 by %c96_i32_54 dim 1 : vector<8x128xf32>, i32 -> vector<8x128xf32>
    %159 = arith.mulf %158, %117 : vector<8x128xf32>
    %c64_i32_55 = arith.constant 64 : i32
    %160 = tpu.dynamic_rotate %157 by %c64_i32_55 dim 1 : vector<8x128xf32>, i32 -> vector<8x128xf32>
    %161 = arith.mulf %156, %160 : vector<8x128xf32>
    %162 = arith.addf %159, %161 : vector<8x128xf32>
    %c32_i32_56 = arith.constant 32 : i32
    %163 = tpu.dynamic_rotate %156 by %c32_i32_56 dim 1 : vector<8x128xf32>, i32 -> vector<8x128xf32>
    %164 = math.tanh %162 : vector<8x128xf32>
    %165 = arith.mulf %163, %164 : vector<8x128xf32>
    %c3_i32 = arith.constant 3 : i32
    %c8_i32_57 = arith.constant 8 : i32
    %166 = arith.muli %c3_i32, %c8_i32_57 : i32
    %167 = tpu.assume_multiple %166, 8 : i32
    %c1_i32_58 = arith.constant 1 : i32
    %168 = arith.addi %c3_i32, %c1_i32_58 : i32
    %c8_i32_59 = arith.constant 8 : i32
    %169 = arith.muli %168, %c8_i32_59 : i32
    %170 = tpu.assume_multiple %169, 8 : i32
    %171 = arith.select %6, %165, %144 : vector<8x128xi1>, vector<8x128xf32>
    %172 = arith.truncf %171 : vector<8x128xf32> to vector<8x128xbf16>
    %cst_60 = arith.constant dense<0.000000e+00> : vector<8x256xf32>
    %173 = tpu.matmul %172, %0, %cst_60 {dimension_numbers = #tpu.dot_dimension_numbers<[1], [0], [0], [1], [0, 0, 1, 1], [], []>} : vector<8x128xbf16>, vector<128x256xbf16>, vector<8x256xf32> -> vector<8x256xf32>
    %174 = vector.extract_strided_slice %173 {offsets = [0, 0], sizes = [8, 128], strides = [1, 1]} : vector<8x256xf32> to vector<8x128xf32>
    %175 = arith.addf %174, %3 : vector<8x128xf32>
    %176 = arith.negf %175 : vector<8x128xf32>
    %177 = math.exp %176 : vector<8x128xf32>
    %cst_61 = arith.constant 1.000000e+00 : f32
    %178 = vector.broadcast %cst_61 : f32 to vector<8x128xf32>
    %179 = arith.addf %178, %177 : vector<8x128xf32>
    %180 = arith.divf %178, %179 : vector<8x128xf32>
    %181 = math.tanh %175 : vector<8x128xf32>
    %182 = arith.mulf %180, %141 : vector<8x128xf32>
    %c32_i32_62 = arith.constant 32 : i32
    %183 = tpu.dynamic_rotate %180 by %c32_i32_62 dim 1 : vector<8x128xf32>, i32 -> vector<8x128xf32>
    %c96_i32_63 = arith.constant 96 : i32
    %184 = tpu.dynamic_rotate %181 by %c96_i32_63 dim 1 : vector<8x128xf32>, i32 -> vector<8x128xf32>
    %185 = arith.mulf %183, %184 : vector<8x128xf32>
    %186 = arith.addf %182, %185 : vector<8x128xf32>
    %c64_i32_64 = arith.constant 64 : i32
    %187 = tpu.dynamic_rotate %180 by %c64_i32_64 dim 1 : vector<8x128xf32>, i32 -> vector<8x128xf32>
    %188 = math.tanh %186 : vector<8x128xf32>
    %189 = arith.mulf %187, %188 : vector<8x128xf32>
    %190 = arith.select %6, %165, %189 : vector<8x128xi1>, vector<8x128xf32>
    %191 = arith.index_cast %167 : i32 to index
    %c0_65 = arith.constant 0 : index
    %192 = vector.load %arg9[%191, %c0_65] : memref<64x128xf32, #tpu.memory_space<vmem>>, vector<8x128xf32>
    tpu.vector_store %arg9[%191, %c0_65], %190 {strides = array<i32>} : memref<64x128xf32, #tpu.memory_space<vmem>>, vector<8x128xf32>,
    %193 = vector.extract_strided_slice %173 {offsets = [0, 128], sizes = [8, 128], strides = [1, 1]} : vector<8x256xf32> to vector<8x128xf32>
    %194 = arith.index_cast %170 : i32 to index
    %c0_66 = arith.constant 0 : index
    %195 = vector.load %arg8[%194, %c0_66] : memref<72x128xf32, #tpu.memory_space<vmem>>, vector<8x128xf32>
    %196 = arith.addf %193, %195 : vector<8x128xf32>
    %197 = arith.negf %196 : vector<8x128xf32>
    %198 = math.exp %197 : vector<8x128xf32>
    %cst_67 = arith.constant 1.000000e+00 : f32
    %199 = vector.broadcast %cst_67 : f32 to vector<8x128xf32>
    %200 = arith.addf %199, %198 : vector<8x128xf32>
    %201 = arith.divf %199, %200 : vector<8x128xf32>
    %202 = math.tanh %196 : vector<8x128xf32>
    %c96_i32_68 = arith.constant 96 : i32
    %203 = tpu.dynamic_rotate %201 by %c96_i32_68 dim 1 : vector<8x128xf32>, i32 -> vector<8x128xf32>
    %204 = arith.mulf %203, %162 : vector<8x128xf32>
    %c64_i32_69 = arith.constant 64 : i32
    %205 = tpu.dynamic_rotate %202 by %c64_i32_69 dim 1 : vector<8x128xf32>, i32 -> vector<8x128xf32>
    %206 = arith.mulf %201, %205 : vector<8x128xf32>
    %207 = arith.addf %204, %206 : vector<8x128xf32>
    %c32_i32_70 = arith.constant 32 : i32
    %208 = tpu.dynamic_rotate %201 by %c32_i32_70 dim 1 : vector<8x128xf32>, i32 -> vector<8x128xf32>
    %209 = math.tanh %207 : vector<8x128xf32>
    %210 = arith.mulf %208, %209 : vector<8x128xf32>
    %c4_i32 = arith.constant 4 : i32
    %c8_i32_71 = arith.constant 8 : i32
    %211 = arith.muli %c4_i32, %c8_i32_71 : i32
    %212 = tpu.assume_multiple %211, 8 : i32
    %c1_i32_72 = arith.constant 1 : i32
    %213 = arith.addi %c4_i32, %c1_i32_72 : i32
    %c8_i32_73 = arith.constant 8 : i32
    %214 = arith.muli %213, %c8_i32_73 : i32
    %215 = tpu.assume_multiple %214, 8 : i32
    %216 = arith.select %6, %210, %189 : vector<8x128xi1>, vector<8x128xf32>
    %217 = arith.truncf %216 : vector<8x128xf32> to vector<8x128xbf16>
    %cst_74 = arith.constant dense<0.000000e+00> : vector<8x256xf32>
    %218 = tpu.matmul %217, %0, %cst_74 {dimension_numbers = #tpu.dot_dimension_numbers<[1], [0], [0], [1], [0, 0, 1, 1], [], []>} : vector<8x128xbf16>, vector<128x256xbf16>, vector<8x256xf32> -> vector<8x256xf32>
    %219 = vector.extract_strided_slice %218 {offsets = [0, 0], sizes = [8, 128], strides = [1, 1]} : vector<8x256xf32> to vector<8x128xf32>
    %220 = arith.addf %219, %3 : vector<8x128xf32>
    %221 = arith.negf %220 : vector<8x128xf32>
    %222 = math.exp %221 : vector<8x128xf32>
    %cst_75 = arith.constant 1.000000e+00 : f32
    %223 = vector.broadcast %cst_75 : f32 to vector<8x128xf32>
    %224 = arith.addf %223, %222 : vector<8x128xf32>
    %225 = arith.divf %223, %224 : vector<8x128xf32>
    %226 = math.tanh %220 : vector<8x128xf32>
    %227 = arith.mulf %225, %186 : vector<8x128xf32>
    %c32_i32_76 = arith.constant 32 : i32
    %228 = tpu.dynamic_rotate %225 by %c32_i32_76 dim 1 : vector<8x128xf32>, i32 -> vector<8x128xf32>
    %c96_i32_77 = arith.constant 96 : i32
    %229 = tpu.dynamic_rotate %226 by %c96_i32_77 dim 1 : vector<8x128xf32>, i32 -> vector<8x128xf32>
    %230 = arith.mulf %228, %229 : vector<8x128xf32>
    %231 = arith.addf %227, %230 : vector<8x128xf32>
    %c64_i32_78 = arith.constant 64 : i32
    %232 = tpu.dynamic_rotate %225 by %c64_i32_78 dim 1 : vector<8x128xf32>, i32 -> vector<8x128xf32>
    %233 = math.tanh %231 : vector<8x128xf32>
    %234 = arith.mulf %232, %233 : vector<8x128xf32>
    %235 = arith.select %6, %210, %234 : vector<8x128xi1>, vector<8x128xf32>
    %236 = arith.index_cast %212 : i32 to index
    %c0_79 = arith.constant 0 : index
    %237 = vector.load %arg9[%236, %c0_79] : memref<64x128xf32, #tpu.memory_space<vmem>>, vector<8x128xf32>
    tpu.vector_store %arg9[%236, %c0_79], %235 {strides = array<i32>} : memref<64x128xf32, #tpu.memory_space<vmem>>, vector<8x128xf32>,
    %238 = vector.extract_strided_slice %218 {offsets = [0, 128], sizes = [8, 128], strides = [1, 1]} : vector<8x256xf32> to vector<8x128xf32>
    %239 = arith.index_cast %215 : i32 to index
    %c0_80 = arith.constant 0 : index
    %240 = vector.load %arg8[%239, %c0_80] : memref<72x128xf32, #tpu.memory_space<vmem>>, vector<8x128xf32>
    %241 = arith.addf %238, %240 : vector<8x128xf32>
    %242 = arith.negf %241 : vector<8x128xf32>
    %243 = math.exp %242 : vector<8x128xf32>
    %cst_81 = arith.constant 1.000000e+00 : f32
    %244 = vector.broadcast %cst_81 : f32 to vector<8x128xf32>
    %245 = arith.addf %244, %243 : vector<8x128xf32>
    %246 = arith.divf %244, %245 : vector<8x128xf32>
    %247 = math.tanh %241 : vector<8x128xf32>
    %c96_i32_82 = arith.constant 96 : i32
    %248 = tpu.dynamic_rotate %246 by %c96_i32_82 dim 1 : vector<8x128xf32>, i32 -> vector<8x128xf32>
    %249 = arith.mulf %248, %207 : vector<8x128xf32>
    %c64_i32_83 = arith.constant 64 : i32
    %250 = tpu.dynamic_rotate %247 by %c64_i32_83 dim 1 : vector<8x128xf32>, i32 -> vector<8x128xf32>
    %251 = arith.mulf %246, %250 : vector<8x128xf32>
    %252 = arith.addf %249, %251 : vector<8x128xf32>
    %c32_i32_84 = arith.constant 32 : i32
    %253 = tpu.dynamic_rotate %246 by %c32_i32_84 dim 1 : vector<8x128xf32>, i32 -> vector<8x128xf32>
    %254 = math.tanh %252 : vector<8x128xf32>
    %255 = arith.mulf %253, %254 : vector<8x128xf32>
    %c5_i32 = arith.constant 5 : i32
    %c8_i32_85 = arith.constant 8 : i32
    %256 = arith.muli %c5_i32, %c8_i32_85 : i32
    %257 = tpu.assume_multiple %256, 8 : i32
    %c1_i32_86 = arith.constant 1 : i32
    %258 = arith.addi %c5_i32, %c1_i32_86 : i32
    %c8_i32_87 = arith.constant 8 : i32
    %259 = arith.muli %258, %c8_i32_87 : i32
    %260 = tpu.assume_multiple %259, 8 : i32
    %261 = arith.select %6, %255, %234 : vector<8x128xi1>, vector<8x128xf32>
    %262 = arith.truncf %261 : vector<8x128xf32> to vector<8x128xbf16>
    %cst_88 = arith.constant dense<0.000000e+00> : vector<8x256xf32>
    %263 = tpu.matmul %262, %0, %cst_88 {dimension_numbers = #tpu.dot_dimension_numbers<[1], [0], [0], [1], [0, 0, 1, 1], [], []>} : vector<8x128xbf16>, vector<128x256xbf16>, vector<8x256xf32> -> vector<8x256xf32>
    %264 = vector.extract_strided_slice %263 {offsets = [0, 0], sizes = [8, 128], strides = [1, 1]} : vector<8x256xf32> to vector<8x128xf32>
    %265 = arith.addf %264, %3 : vector<8x128xf32>
    %266 = arith.negf %265 : vector<8x128xf32>
    %267 = math.exp %266 : vector<8x128xf32>
    %cst_89 = arith.constant 1.000000e+00 : f32
    %268 = vector.broadcast %cst_89 : f32 to vector<8x128xf32>
    %269 = arith.addf %268, %267 : vector<8x128xf32>
    %270 = arith.divf %268, %269 : vector<8x128xf32>
    %271 = math.tanh %265 : vector<8x128xf32>
    %272 = arith.mulf %270, %231 : vector<8x128xf32>
    %c32_i32_90 = arith.constant 32 : i32
    %273 = tpu.dynamic_rotate %270 by %c32_i32_90 dim 1 : vector<8x128xf32>, i32 -> vector<8x128xf32>
    %c96_i32_91 = arith.constant 96 : i32
    %274 = tpu.dynamic_rotate %271 by %c96_i32_91 dim 1 : vector<8x128xf32>, i32 -> vector<8x128xf32>
    %275 = arith.mulf %273, %274 : vector<8x128xf32>
    %276 = arith.addf %272, %275 : vector<8x128xf32>
    %c64_i32_92 = arith.constant 64 : i32
    %277 = tpu.dynamic_rotate %270 by %c64_i32_92 dim 1 : vector<8x128xf32>, i32 -> vector<8x128xf32>
    %278 = math.tanh %276 : vector<8x128xf32>
    %279 = arith.mulf %277, %278 : vector<8x128xf32>
    %280 = arith.select %6, %255, %279 : vector<8x128xi1>, vector<8x128xf32>
    %281 = arith.index_cast %257 : i32 to index
    %c0_93 = arith.constant 0 : index
    %282 = vector.load %arg9[%281, %c0_93] : memref<64x128xf32, #tpu.memory_space<vmem>>, vector<8x128xf32>
    tpu.vector_store %arg9[%281, %c0_93], %280 {strides = array<i32>} : memref<64x128xf32, #tpu.memory_space<vmem>>, vector<8x128xf32>,
    %283 = vector.extract_strided_slice %263 {offsets = [0, 128], sizes = [8, 128], strides = [1, 1]} : vector<8x256xf32> to vector<8x128xf32>
    %284 = arith.index_cast %260 : i32 to index
    %c0_94 = arith.constant 0 : index
    %285 = vector.load %arg8[%284, %c0_94] : memref<72x128xf32, #tpu.memory_space<vmem>>, vector<8x128xf32>
    %286 = arith.addf %283, %285 : vector<8x128xf32>
    %287 = arith.negf %286 : vector<8x128xf32>
    %288 = math.exp %287 : vector<8x128xf32>
    %cst_95 = arith.constant 1.000000e+00 : f32
    %289 = vector.broadcast %cst_95 : f32 to vector<8x128xf32>
    %290 = arith.addf %289, %288 : vector<8x128xf32>
    %291 = arith.divf %289, %290 : vector<8x128xf32>
    %292 = math.tanh %286 : vector<8x128xf32>
    %c96_i32_96 = arith.constant 96 : i32
    %293 = tpu.dynamic_rotate %291 by %c96_i32_96 dim 1 : vector<8x128xf32>, i32 -> vector<8x128xf32>
    %294 = arith.mulf %293, %252 : vector<8x128xf32>
    %c64_i32_97 = arith.constant 64 : i32
    %295 = tpu.dynamic_rotate %292 by %c64_i32_97 dim 1 : vector<8x128xf32>, i32 -> vector<8x128xf32>
    %296 = arith.mulf %291, %295 : vector<8x128xf32>
    %297 = arith.addf %294, %296 : vector<8x128xf32>
    %c32_i32_98 = arith.constant 32 : i32
    %298 = tpu.dynamic_rotate %291 by %c32_i32_98 dim 1 : vector<8x128xf32>, i32 -> vector<8x128xf32>
    %299 = math.tanh %297 : vector<8x128xf32>
    %300 = arith.mulf %298, %299 : vector<8x128xf32>
    %c6_i32 = arith.constant 6 : i32
    %c8_i32_99 = arith.constant 8 : i32
    %301 = arith.muli %c6_i32, %c8_i32_99 : i32
    %302 = tpu.assume_multiple %301, 8 : i32
    %c1_i32_100 = arith.constant 1 : i32
    %303 = arith.addi %c6_i32, %c1_i32_100 : i32
    %c8_i32_101 = arith.constant 8 : i32
    %304 = arith.muli %303, %c8_i32_101 : i32
    %305 = tpu.assume_multiple %304, 8 : i32
    %306 = arith.select %6, %300, %279 : vector<8x128xi1>, vector<8x128xf32>
    %307 = arith.truncf %306 : vector<8x128xf32> to vector<8x128xbf16>
    %cst_102 = arith.constant dense<0.000000e+00> : vector<8x256xf32>
    %308 = tpu.matmul %307, %0, %cst_102 {dimension_numbers = #tpu.dot_dimension_numbers<[1], [0], [0], [1], [0, 0, 1, 1], [], []>} : vector<8x128xbf16>, vector<128x256xbf16>, vector<8x256xf32> -> vector<8x256xf32>
    %309 = vector.extract_strided_slice %308 {offsets = [0, 0], sizes = [8, 128], strides = [1, 1]} : vector<8x256xf32> to vector<8x128xf32>
    %310 = arith.addf %309, %3 : vector<8x128xf32>
    %311 = arith.negf %310 : vector<8x128xf32>
    %312 = math.exp %311 : vector<8x128xf32>
    %cst_103 = arith.constant 1.000000e+00 : f32
    %313 = vector.broadcast %cst_103 : f32 to vector<8x128xf32>
    %314 = arith.addf %313, %312 : vector<8x128xf32>
    %315 = arith.divf %313, %314 : vector<8x128xf32>
    %316 = math.tanh %310 : vector<8x128xf32>
    %317 = arith.mulf %315, %276 : vector<8x128xf32>
    %c32_i32_104 = arith.constant 32 : i32
    %318 = tpu.dynamic_rotate %315 by %c32_i32_104 dim 1 : vector<8x128xf32>, i32 -> vector<8x128xf32>
    %c96_i32_105 = arith.constant 96 : i32
    %319 = tpu.dynamic_rotate %316 by %c96_i32_105 dim 1 : vector<8x128xf32>, i32 -> vector<8x128xf32>
    %320 = arith.mulf %318, %319 : vector<8x128xf32>
    %321 = arith.addf %317, %320 : vector<8x128xf32>
    %c64_i32_106 = arith.constant 64 : i32
    %322 = tpu.dynamic_rotate %315 by %c64_i32_106 dim 1 : vector<8x128xf32>, i32 -> vector<8x128xf32>
    %323 = math.tanh %321 : vector<8x128xf32>
    %324 = arith.mulf %322, %323 : vector<8x128xf32>
    %325 = arith.select %6, %300, %324 : vector<8x128xi1>, vector<8x128xf32>
    %326 = arith.index_cast %302 : i32 to index
    %c0_107 = arith.constant 0 : index
    %327 = vector.load %arg9[%326, %c0_107] : memref<64x128xf32, #tpu.memory_space<vmem>>, vector<8x128xf32>
    tpu.vector_store %arg9[%326, %c0_107], %325 {strides = array<i32>} : memref<64x128xf32, #tpu.memory_space<vmem>>, vector<8x128xf32>,
    %328 = vector.extract_strided_slice %308 {offsets = [0, 128], sizes = [8, 128], strides = [1, 1]} : vector<8x256xf32> to vector<8x128xf32>
    %329 = arith.index_cast %305 : i32 to index
    %c0_108 = arith.constant 0 : index
    %330 = vector.load %arg8[%329, %c0_108] : memref<72x128xf32, #tpu.memory_space<vmem>>, vector<8x128xf32>
    %331 = arith.addf %328, %330 : vector<8x128xf32>
    %332 = arith.negf %331 : vector<8x128xf32>
    %333 = math.exp %332 : vector<8x128xf32>
    %cst_109 = arith.constant 1.000000e+00 : f32
    %334 = vector.broadcast %cst_109 : f32 to vector<8x128xf32>
    %335 = arith.addf %334, %333 : vector<8x128xf32>
    %336 = arith.divf %334, %335 : vector<8x128xf32>
    %337 = math.tanh %331 : vector<8x128xf32>
    %c96_i32_110 = arith.constant 96 : i32
    %338 = tpu.dynamic_rotate %336 by %c96_i32_110 dim 1 : vector<8x128xf32>, i32 -> vector<8x128xf32>
    %339 = arith.mulf %338, %297 : vector<8x128xf32>
    %c64_i32_111 = arith.constant 64 : i32
    %340 = tpu.dynamic_rotate %337 by %c64_i32_111 dim 1 : vector<8x128xf32>, i32 -> vector<8x128xf32>
    %341 = arith.mulf %336, %340 : vector<8x128xf32>
    %342 = arith.addf %339, %341 : vector<8x128xf32>
    %c32_i32_112 = arith.constant 32 : i32
    %343 = tpu.dynamic_rotate %336 by %c32_i32_112 dim 1 : vector<8x128xf32>, i32 -> vector<8x128xf32>
    %344 = math.tanh %342 : vector<8x128xf32>
    %345 = arith.mulf %343, %344 : vector<8x128xf32>
    %c7_i32 = arith.constant 7 : i32
    %c8_i32_113 = arith.constant 8 : i32
    %346 = arith.muli %c7_i32, %c8_i32_113 : i32
    %347 = tpu.assume_multiple %346, 8 : i32
    %c1_i32_114 = arith.constant 1 : i32
    %348 = arith.addi %c7_i32, %c1_i32_114 : i32
    %c8_i32_115 = arith.constant 8 : i32
    %349 = arith.muli %348, %c8_i32_115 : i32
    %350 = tpu.assume_multiple %349, 8 : i32
    %351 = arith.select %6, %345, %324 : vector<8x128xi1>, vector<8x128xf32>
    %352 = arith.truncf %351 : vector<8x128xf32> to vector<8x128xbf16>
    %cst_116 = arith.constant dense<0.000000e+00> : vector<8x256xf32>
    %353 = tpu.matmul %352, %0, %cst_116 {dimension_numbers = #tpu.dot_dimension_numbers<[1], [0], [0], [1], [0, 0, 1, 1], [], []>} : vector<8x128xbf16>, vector<128x256xbf16>, vector<8x256xf32> -> vector<8x256xf32>
    %354 = vector.extract_strided_slice %353 {offsets = [0, 0], sizes = [8, 128], strides = [1, 1]} : vector<8x256xf32> to vector<8x128xf32>
    %355 = arith.addf %354, %3 : vector<8x128xf32>
    %356 = arith.negf %355 : vector<8x128xf32>
    %357 = math.exp %356 : vector<8x128xf32>
    %cst_117 = arith.constant 1.000000e+00 : f32
    %358 = vector.broadcast %cst_117 : f32 to vector<8x128xf32>
    %359 = arith.addf %358, %357 : vector<8x128xf32>
    %360 = arith.divf %358, %359 : vector<8x128xf32>
    %361 = math.tanh %355 : vector<8x128xf32>
    %362 = arith.mulf %360, %321 : vector<8x128xf32>
    %c32_i32_118 = arith.constant 32 : i32
    %363 = tpu.dynamic_rotate %360 by %c32_i32_118 dim 1 : vector<8x128xf32>, i32 -> vector<8x128xf32>
    %c96_i32_119 = arith.constant 96 : i32
    %364 = tpu.dynamic_rotate %361 by %c96_i32_119 dim 1 : vector<8x128xf32>, i32 -> vector<8x128xf32>
    %365 = arith.mulf %363, %364 : vector<8x128xf32>
    %366 = arith.addf %362, %365 : vector<8x128xf32>
    %c64_i32_120 = arith.constant 64 : i32
    %367 = tpu.dynamic_rotate %360 by %c64_i32_120 dim 1 : vector<8x128xf32>, i32 -> vector<8x128xf32>
    %368 = math.tanh %366 : vector<8x128xf32>
    %369 = arith.mulf %367, %368 : vector<8x128xf32>
    %370 = arith.select %6, %345, %369 : vector<8x128xi1>, vector<8x128xf32>
    %371 = arith.index_cast %347 : i32 to index
    %c0_121 = arith.constant 0 : index
    %372 = vector.load %arg9[%371, %c0_121] : memref<64x128xf32, #tpu.memory_space<vmem>>, vector<8x128xf32>
    tpu.vector_store %arg9[%371, %c0_121], %370 {strides = array<i32>} : memref<64x128xf32, #tpu.memory_space<vmem>>, vector<8x128xf32>,
    %373 = vector.extract_strided_slice %353 {offsets = [0, 128], sizes = [8, 128], strides = [1, 1]} : vector<8x256xf32> to vector<8x128xf32>
    %374 = arith.index_cast %350 : i32 to index
    %c0_122 = arith.constant 0 : index
    %375 = vector.load %arg8[%374, %c0_122] : memref<72x128xf32, #tpu.memory_space<vmem>>, vector<8x128xf32>
    %376 = arith.addf %373, %375 : vector<8x128xf32>
    %377 = arith.negf %376 : vector<8x128xf32>
    %378 = math.exp %377 : vector<8x128xf32>
    %cst_123 = arith.constant 1.000000e+00 : f32
    %379 = vector.broadcast %cst_123 : f32 to vector<8x128xf32>
    %380 = arith.addf %379, %378 : vector<8x128xf32>
    %381 = arith.divf %379, %380 : vector<8x128xf32>
    %382 = math.tanh %376 : vector<8x128xf32>
    %c96_i32_124 = arith.constant 96 : i32
    %383 = tpu.dynamic_rotate %381 by %c96_i32_124 dim 1 : vector<8x128xf32>, i32 -> vector<8x128xf32>
    %384 = arith.mulf %383, %342 : vector<8x128xf32>
    %c64_i32_125 = arith.constant 64 : i32
    %385 = tpu.dynamic_rotate %382 by %c64_i32_125 dim 1 : vector<8x128xf32>, i32 -> vector<8x128xf32>
    %386 = arith.mulf %381, %385 : vector<8x128xf32>
    %387 = arith.addf %384, %386 : vector<8x128xf32>
    %c32_i32_126 = arith.constant 32 : i32
    %388 = tpu.dynamic_rotate %381 by %c32_i32_126 dim 1 : vector<8x128xf32>, i32 -> vector<8x128xf32>
    %389 = math.tanh %387 : vector<8x128xf32>
    %390 = arith.mulf %388, %389 : vector<8x128xf32>
    %c8_i32_127 = arith.constant 8 : i32
    %c0_128 = arith.constant 0 : index
    %c0_129 = arith.constant 0 : index
    %391 = vector.load %arg9[%c0_128, %c0_129] : memref<64x128xf32, #tpu.memory_space<vmem>>, vector<64x128xf32>
    %c0_130 = arith.constant 0 : index
    %c0_131 = arith.constant 0 : index
    %392 = vector.load %arg5[%c0_130, %c0_131] : memref<128x128xf32, #tpu.memory_space<vmem>>, vector<128x128xf32>
    %cst_132 = arith.constant dense<0.000000e+00> : vector<64x128xf32>
    %393 = tpu.matmul %391, %392, %cst_132 {dimension_numbers = #tpu.dot_dimension_numbers<[1], [0], [0], [1], [0, 0, 1, 1], [], []>} : vector<64x128xf32>, vector<128x128xf32>, vector<64x128xf32> -> vector<64x128xf32>
    %c0_133 = arith.constant 0 : index
    %c0_134 = arith.constant 0 : index
    %394 = vector.load %arg6[%c0_133, %c0_134] : memref<1x128xf32, #tpu.memory_space<vmem>>, vector<1x128xf32>
    %395 = vector.broadcast %394 : vector<1x128xf32> to vector<64x128xf32>
    %396 = arith.addf %393, %395 : vector<64x128xf32>
    %397 = arith.negf %396 : vector<64x128xf32>
    %398 = math.exp %397 : vector<64x128xf32>
    %cst_135 = arith.constant 1.000000e+00 : f32
    %399 = vector.broadcast %cst_135 : f32 to vector<64x128xf32>
    %400 = arith.addf %399, %398 : vector<64x128xf32>
    %401 = arith.divf %399, %400 : vector<64x128xf32>
    %c0_136 = arith.constant 0 : index
    %c0_137 = arith.constant 0 : index
    %402 = vector.load %arg7[%c0_136, %c0_137] : memref<64x128xf32, #tpu.memory_space<vmem>>, vector<64x128xf32>
    tpu.vector_store %arg7[%c0_136, %c0_137], %401 {strides = array<i32>} : memref<64x128xf32, #tpu.memory_space<vmem>>, vector<64x128xf32>,
    return
  }
}

</mosaic_0001>

<llo_original>
// kernel: lstm_res_head_forward.1
$region0: #{lstm_res_head_forward.1}
  #allocation0 [shape = 'u32[]', space=smem, size = 0x4, offset = 0x4, fixed_abs, tag = 'smem constant byte address 0x4 - core index']
  #allocation1 [shape = 'u32[144,128]{1,0:T(1,128)}', space=vmem, size = 0x12000, scoped, tag = 'internal scratch']
  #allocation2 [shape = 'f32[72,128]{1,0:T(8,128)}', space=vmem, size = 0x9000, scoped, tag = 'scratch operand']
  #allocation3 [shape = 'f32[64,128]{1,0:T(8,128)}', space=vmem, size = 0x8000, scoped, tag = 'scratch operand']
  %s0 = inlined_call_operand.vmem [shape: f32[72,32], index: 0, kind: input, shape index: {}]
  %s1 = inlined_call_operand.vmem [shape: bf16[32,128], index: 1, kind: input, shape index: {}]
  %s2 = inlined_call_operand.vmem [shape: f32[1,128], index: 2, kind: input, shape index: {}]
  %s3 = inlined_call_operand.vmem [shape: bf16[128,256], index: 3, kind: input, shape index: {}]
  %s4 = inlined_call_operand.vmem [shape: f32[1,128], index: 4, kind: input, shape index: {}]
  %s5 = inlined_call_operand.vmem [shape: f32[128,128], index: 5, kind: input, shape index: {}]
  %s6 = inlined_call_operand.vmem [shape: f32[1,128], index: 6, kind: input, shape index: {}]
  %s7 = inlined_call_operand.vmem [shape: f32[64,128], index: 7, kind: output, shape index: {}]
  %s8 = sld [smem:[#allocation0]]
  $region38: #{lstm_res_head_forward.1} parent=0
    _
  %s10 = ssub.s32 1, %s8
  %s11 = scalar_select 0, %s10, %s8
  // Predicated region
  $region2: #{lstm_res_head_forward.1} parent=0 // pred_check
    _
  $region3: #{lstm_res_head_forward.1} parent=0 // pred_check_branch
    %13 = sbr.rel (0) target = $region5
  $region4: #{lstm_res_head_forward.1} parent=0 // pred_region
    _
  $region5: #{lstm_res_head_forward.1} parent=0 // pred_fallthru
    _
  // Predicated region
  $region6: #{lstm_res_head_forward.1} parent=0 // pred_check
    _
  $region7: #{lstm_res_head_forward.1} parent=0 // pred_check_branch
    %15 = sbr.rel (0) target = $region9
  $region8: #{lstm_res_head_forward.1} parent=0 // pred_region
    _
  $region9: #{lstm_res_head_forward.1} parent=0 // pred_fallthru
    _
  // Predicated region
  $region10: #{lstm_res_head_forward.1} parent=0 // pred_check
    _
  $region11: #{lstm_res_head_forward.1} parent=0 // pred_check_branch
    %17 = sbr.rel (0) target = $region13
  $region12: #{lstm_res_head_forward.1} parent=0 // pred_region
    _
  $region13: #{lstm_res_head_forward.1} parent=0 // pred_fallthru
    _
  // Predicated region
  $region14: #{lstm_res_head_forward.1} parent=0 // pred_check
    _
  $region15: #{lstm_res_head_forward.1} parent=0 // pred_check_branch
    %19 = sbr.rel (0) target = $region17
  $region16: #{lstm_res_head_forward.1} parent=0 // pred_region
    _
  $region17: #{lstm_res_head_forward.1} parent=0 // pred_fallthru
    _
  // Predicated region
  $region18: #{lstm_res_head_forward.1} parent=0 // pred_check
    _
  $region19: #{lstm_res_head_forward.1} parent=0 // pred_check_branch
    %21 = sbr.rel (0) target = $region21
  $region20: #{lstm_res_head_forward.1} parent=0 // pred_region
    _
  $region21: #{lstm_res_head_forward.1} parent=0 // pred_fallthru
    _
  // Predicated region
  $region22: #{lstm_res_head_forward.1} parent=0 // pred_check
    _
  $region23: #{lstm_res_head_forward.1} parent=0 // pred_check_branch
    %23 = sbr.rel (0) target = $region25
  $region24: #{lstm_res_head_forward.1} parent=0 // pred_region
    _
  $region25: #{lstm_res_head_forward.1} parent=0 // pred_fallthru
    _
  // Predicated region
  $region26: #{lstm_res_head_forward.1} parent=0 // pred_check
    _
  $region27: #{lstm_res_head_forward.1} parent=0 // pred_check_branch
    %25 = sbr.rel (0) target = $region29
  $region28: #{lstm_res_head_forward.1} parent=0 // pred_region
    _
  $region29: #{lstm_res_head_forward.1} parent=0 // pred_fallthru
    _
  %v27 = vld [vmem:[%s3] sm:$0xff]
  %v28 = vld [vmem:[%s3 + $0x8] sm:$0xff]
  %v29 = vld [vmem:[%s3 + $0x10] sm:$0xff]
  %v30 = vld [vmem:[%s3 + $0x18] sm:$0xff]
  %v31 = vld [vmem:[%s3 + $0x20] sm:$0xff]
  %v32 = vld [vmem:[%s3 + $0x28] sm:$0xff]
  %v33 = vld [vmem:[%s3 + $0x30] sm:$0xff]
  %v34 = vld [vmem:[%s3 + $0x38] sm:$0xff]
  %v35 = vld [vmem:[%s3 + $0x40] sm:$0xff]
  %v36 = vld [vmem:[%s3 + $0x48] sm:$0xff]
  %v37 = vld [vmem:[%s3 + $0x50] sm:$0xff]
  %v38 = vld [vmem:[%s3 + $0x58] sm:$0xff]
  %v39 = vld [vmem:[%s3 + $0x60] sm:$0xff]
  %v40 = vld [vmem:[%s3 + $0x68] sm:$0xff]
  %v41 = vld [vmem:[%s3 + $0x70] sm:$0xff]
  %v42 = vld [vmem:[%s3 + $0x78] sm:$0xff]
  %v43 = vld [vmem:[%s4] sm:$0x1]
  %v45 = vlaneseq
  %v46 = vshrl.u32 %v45, 7
  %v47 = vsub.s32 0, %v46
  %v48 = vrot.slane %v43, %v47
  %v50 = vlaneseq
  %v51 = vand.u32 %v50, 127
  %vm52 = vcmp.lt.s32.totalorder %v51, 32
  %v53 = vld [vmem:[%s0] sm:$0xff]
  %v54 = vld [vmem:[%s0 + $0x8] sm:$0xff]
  %v55 = vld [vmem:[%s0 + $0x10] sm:$0xff]
  %v56 = vld [vmem:[%s0 + $0x18] sm:$0xff]
  %v57 = vld [vmem:[%s0 + $0x20] sm:$0xff]
  %v58 = vld [vmem:[%s0 + $0x28] sm:$0xff]
  %v59 = vld [vmem:[%s0 + $0x30] sm:$0xff]
  %v60 = vld [vmem:[%s0 + $0x38] sm:$0xff]
  %v61 = vld [vmem:[%s0 + $0x40] sm:$0xff]
  %v62 = vpack.c.bf16 %v54, %v53
  %v63 = vpack.c.bf16 %v56, %v55
  %v64 = vpack.c.bf16 %v58, %v57
  %v65 = vpack.c.bf16 %v60, %v59
  %v66 = vpack.c.bf16 %v61, %v61
  %v67 = vld [vmem:[%s1] sm:$0xf]
  %v68 = vld [vmem:[%s1 + $0x4] sm:$0xf]
  %v69 = vld [vmem:[%s1 + $0x8] sm:$0xf]
  %v70 = vld [vmem:[%s1 + $0xc] sm:$0xf]
  %v71 = vld [vmem:[%s2] sm:$0x1]
  %v73 = vlaneseq
  %v74 = vshrl.u32 %v73, 7
  %v75 = vsub.s32 0, %v74
  %v76 = vrot.slane %v71, %v75
  %v82 = vunpack.c.l.b16 %v67
  %v83 = vunpack.c.l.b16 %v68
  %v84 = vunpack.c.l.b16 %v69
  %v85 = vunpack.c.l.b16 %v70
  %v86 = vpack.c.b16 %v83, %v82
  %v87 = vpack.c.b16 %v85, %v84
  %vm90 = vcmask 261120
  %v92 = vsel %vm90, %v62, 0
  %v95 = vsel %vm90, %v63, 0
  %v98 = vsel %vm90, %v64, 0
  %v101 = vsel %vm90, %v65, 0
  %v104 = vsel %vm90, %v66, 0
  %106 = vmatprep.subr.bf16.mxu0 0
  %107 = vmatpush1.bf16.msra.mxu0 0
  %108 = vmatprep.subr.bf16.mxu0 0
  %109 = vmatpush1.bf16.msra.mxu0 0
  %110 = vmatprep.subr.bf16.mxu0 0
  %111 = vmatpush1.bf16.msra.mxu0 0
  %112 = vmatprep.subr.bf16.mxu0 0
  %113 = vmatpush1.bf16.msra.mxu0 0
  %114 = vmatprep.subr.bf16.mxu0 0
  %115 = vmatpush1.bf16.msra.mxu0 0
  %116 = vmatprep.subr.bf16.mxu0 0
  %117 = vmatpush1.bf16.msra.mxu0 0
  %118 = vmatprep.subr.bf16.mxu0 0
  %119 = vmatpush1.bf16.msra.mxu0 %v87
  %120 = vmatprep.subr.bf16.mxu0 0
  %121 = vmatpush1.bf16.msra.mxu0 %v86
  %122 = vmatprep.subr.bf16.mxu0 0
  %123 = vmatpush2.bf16.msra.mxu0 0
  %124 = vmatprep.subr.bf16.mxu0 0
  %125 = vmatpush2.bf16.msra.mxu0 0
  %126 = vmatprep.subr.bf16.mxu0 0
  %127 = vmatpush2.bf16.msra.mxu0 0
  %128 = vmatprep.subr.bf16.mxu0 0
  %129 = vmatpush2.bf16.msra.mxu0 0
  %130 = vmatprep.subr.bf16.mxu0 0
  %131 = vmatpush2.bf16.msra.mxu0 0
  %132 = vmatprep.subr.bf16.mxu0 0
  %133 = vmatpush2.bf16.msra.mxu0 0
  %134 = vmatprep.subr.bf16.mxu0 0
  %135 = vmatpush2.bf16.msra.mxu0 0
  %136 = vmatprep.subr.bf16.mxu0 0
  %137 = vmatpush2.bf16.msra.mxu0 0
  %138 = vmatprep.mubr.bf16.mxu0 0
  %139 = vmatmul.mubr.bf16.gmra.mxu0 %v92
  %v140 = vpop.f32.mrf.mxu0
  %v141 = vadd.f32 %v76, %v140
  %v142 = vpop.f32.mrf.mxu0
  %v143 = vpop.f32.mrf.mxu0
  %v144 = vadd.f32 %v76, %v143
  %v145 = vpop.f32.mrf.mxu0
  %146 = vmatprep.mubr.bf16.mxu0 0
  %147 = vmatmul.mubr.bf16.gmra.mxu0 %v95
  %v148 = vpop.f32.mrf.mxu0
  %v149 = vadd.f32 %v76, %v148
  %v150 = vpop.f32.mrf.mxu0
  %v151 = vpop.f32.mrf.mxu0
  %v152 = vadd.f32 %v76, %v151
  %v153 = vpop.f32.mrf.mxu0
  %154 = vmatprep.mubr.bf16.mxu0 0
  %155 = vmatmul.mubr.bf16.gmra.mxu0 %v98
  %v156 = vpop.f32.mrf.mxu0
  %v157 = vadd.f32 %v76, %v156
  %v158 = vpop.f32.mrf.mxu0
  %v159 = vpop.f32.mrf.mxu0
  %v160 = vadd.f32 %v76, %v159
  %v161 = vpop.f32.mrf.mxu0
  %162 = vmatprep.mubr.bf16.mxu0 0
  %163 = vmatmul.mubr.bf16.gmra.mxu0 %v101
  %v164 = vpop.f32.mrf.mxu0
  %v165 = vadd.f32 %v76, %v164
  %v166 = vpop.f32.mrf.mxu0
  %v167 = vpop.f32.mrf.mxu0
  %v168 = vadd.f32 %v76, %v167
  %v169 = vpop.f32.mrf.mxu0
  %170 = vmatprep.mubr.bf16.mxu0 0
  %171 = vmatmul.mubr.bf16.gmra.mxu0 %v104
  %v172 = vpop.f32.mrf.mxu0
  %v173 = vadd.f32 %v76, %v172
  %v174 = vpop.f32.mrf.mxu0
  %v175 = vpop.f32.mrf.mxu0
  %v176 = vpop.f32.mrf.mxu0
  %177 = vdwg.mxu0
  %178 = vst [vmem:[#allocation2] sm:$0xff] %v141
  %179 = vst [vmem:[#allocation2 + $0x8] sm:$0xff] %v144
  %180 = vst [vmem:[#allocation2 + $0x10] sm:$0xff] %v149
  %181 = vst [vmem:[#allocation2 + $0x18] sm:$0xff] %v152
  %182 = vst [vmem:[#allocation2 + $0x20] sm:$0xff] %v157
  %183 = vst [vmem:[#allocation2 + $0x28] sm:$0xff] %v160
  %184 = vst [vmem:[#allocation2 + $0x30] sm:$0xff] %v165
  %185 = vst [vmem:[#allocation2 + $0x38] sm:$0xff] %v168
  %186 = vst [vmem:[#allocation2 + $0x40] sm:$0xff] %v173
  %v187 = vld [vmem:[#allocation2] sm:$0xff]
  %v188 = vxor.u32 %v187, 2147483648
  %v189 = vmul.f32 %v188, 1.442695
  %v190 = vpow.pop %v189
  %v191 = vadd.f32 %v190, 1.0
  %v192 = vrcp.pop %v191
  %v193 = vmul.f32 1.0, %v192
  %v194 = vtanh.pop %v187
  %195 = vrot.lane.b32.xlu0 %v193, 96
  %v196 = vpop.permute.xlu0 %195
  %v197 = vmul.f32 %v196, 0.0
  %198 = vrot.lane.b32.xlu0 %v194, 64
  %v199 = vpop.permute.xlu0 %198
  %v200 = vmul.f32 %v193, %v199
  %v201 = vadd.f32 %v197, %v200
  %202 = vrot.lane.b32.xlu0 %v193, 32
  %v203 = vpop.permute.xlu0 %202
  %v204 = vtanh.pop %v201
  %v205 = vmul.f32 %v203, %v204
  %v206 = vsel %vm52, %v205, 0.0
  %v207 = vpack.c.bf16 %v206, %v206
  %v224 = vunpack.c.l.b16 %v27
  %v225 = vunpack.c.h.b16 %v27
  %v226 = vunpack.c.l.b16 %v28
  %v227 = vunpack.c.h.b16 %v28
  %v228 = vunpack.c.l.b16 %v29
  %v229 = vunpack.c.h.b16 %v29
  %v230 = vunpack.c.l.b16 %v30
  %v231 = vunpack.c.h.b16 %v30
  %v232 = vunpack.c.l.b16 %v31
  %v233 = vunpack.c.h.b16 %v31
  %v234 = vunpack.c.l.b16 %v32
  %v235 = vunpack.c.h.b16 %v32
  %v236 = vunpack.c.l.b16 %v33
  %v237 = vunpack.c.h.b16 %v33
  %v238 = vunpack.c.l.b16 %v34
  %v239 = vunpack.c.h.b16 %v34
  %v240 = vunpack.c.l.b16 %v35
  %v241 = vunpack.c.h.b16 %v35
  %v242 = vunpack.c.l.b16 %v36
  %v243 = vunpack.c.h.b16 %v36
  %v244 = vunpack.c.l.b16 %v37
  %v245 = vunpack.c.h.b16 %v37
  %v246 = vunpack.c.l.b16 %v38
  %v247 = vunpack.c.h.b16 %v38
  %v248 = vunpack.c.l.b16 %v39
  %v249 = vunpack.c.h.b16 %v39
  %v250 = vunpack.c.l.b16 %v40
  %v251 = vunpack.c.h.b16 %v40
  %v252 = vunpack.c.l.b16 %v41
  %v253 = vunpack.c.h.b16 %v41
  %v254 = vunpack.c.l.b16 %v42
  %v255 = vunpack.c.h.b16 %v42
  %v256 = vpack.c.b16 %v226, %v224
  %v257 = vpack.c.b16 %v227, %v225
  %v258 = vpack.c.b16 %v230, %v228
  %v259 = vpack.c.b16 %v231, %v229
  %v260 = vpack.c.b16 %v234, %v232
  %v261 = vpack.c.b16 %v235, %v233
  %v262 = vpack.c.b16 %v238, %v236
  %v263 = vpack.c.b16 %v239, %v237
  %v264 = vpack.c.b16 %v242, %v240
  %v265 = vpack.c.b16 %v243, %v241
  %v266 = vpack.c.b16 %v246, %v244
  %v267 = vpack.c.b16 %v247, %v245
  %v268 = vpack.c.b16 %v250, %v248
  %v269 = vpack.c.b16 %v251, %v249
  %v270 = vpack.c.b16 %v254, %v252
  %v271 = vpack.c.b16 %v255, %v253
  %288 = vmatprep.subr.bf16.mxu0 %v271
  %289 = vmatpush1.bf16.msra.mxu0 %v270
  %290 = vmatprep.subr.bf16.mxu0 %v269
  %291 = vmatpush1.bf16.msra.mxu0 %v268
  %292 = vmatprep.subr.bf16.mxu0 %v267
  %293 = vmatpush1.bf16.msra.mxu0 %v266
  %294 = vmatprep.subr.bf16.mxu0 %v265
  %295 = vmatpush1.bf16.msra.mxu0 %v264
  %296 = vmatprep.subr.bf16.mxu0 %v263
  %297 = vmatpush1.bf16.msra.mxu0 %v262
  %298 = vmatprep.subr.bf16.mxu0 %v261
  %299 = vmatpush1.bf16.msra.mxu0 %v260
  %300 = vmatprep.subr.bf16.mxu0 %v259
  %301 = vmatpush1.bf16.msra.mxu0 %v258
  %302 = vmatprep.subr.bf16.mxu0 %v257
  %303 = vmatpush1.bf16.msra.mxu0 %v256
  %304 = vmatprep.subr.bf16.mxu0 0
  %305 = vmatpush2.bf16.msra.mxu0 0
  %306 = vmatprep.subr.bf16.mxu0 0
  %307 = vmatpush2.bf16.msra.mxu0 0
  %308 = vmatprep.subr.bf16.mxu0 0
  %309 = vmatpush2.bf16.msra.mxu0 0
  %310 = vmatprep.subr.bf16.mxu0 0
  %311 = vmatpush2.bf16.msra.mxu0 0
  %312 = vmatprep.subr.bf16.mxu0 0
  %313 = vmatpush2.bf16.msra.mxu0 0
  %314 = vmatprep.subr.bf16.mxu0 0
  %315 = vmatpush2.bf16.msra.mxu0 0
  %316 = vmatprep.subr.bf16.mxu0 0
  %317 = vmatpush2.bf16.msra.mxu0 0
  %318 = vmatprep.subr.bf16.mxu0 0
  %319 = vmatpush2.bf16.msra.mxu0 0
  %320 = vmatprep.mubr.bf16.mxu0 0
  %321 = vmatmul.mubr.bf16.gmra.mxu0 %v207
  %v322 = vpop.f32.mrf.mxu0
  %v323 = vadd.f32 0.0, %v322
  %v324 = vpop.f32.mrf.mxu0
  %v325 = vadd.f32 0.0, %v324
  %v326 = vpop.f32.mrf.mxu0
  %v327 = vpop.f32.mrf.mxu0
  %328 = vdwg.mxu0
  %v329 = vadd.f32 %v323, %v48
  %v330 = vxor.u32 %v329, 2147483648
  %v331 = vmul.f32 %v330, 1.442695
  %v332 = vpow.pop %v331
  %v333 = vadd.f32 %v332, 1.0
  %v334 = vrcp.pop %v333
  %v335 = vmul.f32 1.0, %v334
  %v336 = vtanh.pop %v329
  %v337 = vmul.f32 %v335, 0.0
  %338 = vrot.lane.b32.xlu0 %v335, 32
  %v339 = vpop.permute.xlu0 %338
  %340 = vrot.lane.b32.xlu0 %v336, 96
  %v341 = vpop.permute.xlu0 %340
  %v342 = vmul.f32 %v339, %v341
  %v343 = vadd.f32 %v337, %v342
  %344 = vrot.lane.b32.xlu0 %v335, 64
  %v345 = vpop.permute.xlu0 %344
  %v346 = vtanh.pop %v343
  %v347 = vmul.f32 %v345, %v346
  %v348 = vsel %vm52, %v205, %v347
  %349 = vst [vmem:[#allocation3] sm:$0xff] %v348
  %s350 = scalar_lea.vmem [#allocation2], 8
  %v351 = vld [vmem:[%s350] sm:$0xff]
  %v352 = vadd.f32 %v325, %v351
  %v353 = vxor.u32 %v352, 2147483648
  %v354 = vmul.f32 %v353, 1.442695
  %v355 = vpow.pop %v354
  %v356 = vadd.f32 %v355, 1.0
  %v357 = vrcp.pop %v356
  %v358 = vmul.f32 1.0, %v357
  %v359 = vtanh.pop %v352
  %360 = vrot.lane.b32.xlu0 %v358, 96
  %v361 = vpop.permute.xlu0 %360
  %v362 = vmul.f32 %v361, %v201
  %363 = vrot.lane.b32.xlu0 %v359, 64
  %v364 = vpop.permute.xlu0 %363
  %v365 = vmul.f32 %v358, %v364
  %v366 = vadd.f32 %v362, %v365
  %367 = vrot.lane.b32.xlu0 %v358, 32
  %v368 = vpop.permute.xlu0 %367
  %v369 = vtanh.pop %v366
  %v370 = vmul.f32 %v368, %v369
  %v371 = vsel %vm52, %v370, %v347
  %v372 = vpack.c.bf16 %v371, %v371
  %373 = vmatprep.subr.bf16.mxu0 %v271
  %374 = vmatpush1.bf16.msra.mxu0 %v270
  %375 = vmatprep.subr.bf16.mxu0 %v269
  %376 = vmatpush1.bf16.msra.mxu0 %v268
  %377 = vmatprep.subr.bf16.mxu0 %v267
  %378 = vmatpush1.bf16.msra.mxu0 %v266
  %379 = vmatprep.subr.bf16.mxu0 %v265
  %380 = vmatpush1.bf16.msra.mxu0 %v264
  %381 = vmatprep.subr.bf16.mxu0 %v263
  %382 = vmatpush1.bf16.msra.mxu0 %v262
  %383 = vmatprep.subr.bf16.mxu0 %v261
  %384 = vmatpush1.bf16.msra.mxu0 %v260
  %385 = vmatprep.subr.bf16.mxu0 %v259
  %386 = vmatpush1.bf16.msra.mxu0 %v258
  %387 = vmatprep.subr.bf16.mxu0 %v257
  %388 = vmatpush1.bf16.msra.mxu0 %v256
  %389 = vmatprep.subr.bf16.mxu0 0
  %390 = vmatpush2.bf16.msra.mxu0 0
  %391 = vmatprep.subr.bf16.mxu0 0
  %392 = vmatpush2.bf16.msra.mxu0 0
  %393 = vmatprep.subr.bf16.mxu0 0
  %394 = vmatpush2.bf16.msra.mxu0 0
  %395 = vmatprep.subr.bf16.mxu0 0
  %396 = vmatpush2.bf16.msra.mxu0 0
  %397 = vmatprep.subr.bf16.mxu0 0
  %398 = vmatpush2.bf16.msra.mxu0 0
  %399 = vmatprep.subr.bf16.mxu0 0
  %400 = vmatpush2.bf16.msra.mxu0 0
  %401 = vmatprep.subr.bf16.mxu0 0
  %402 = vmatpush2.bf16.msra.mxu0 0
  %403 = vmatprep.subr.bf16.mxu0 0
  %404 = vmatpush2.bf16.msra.mxu0 0
  %405 = vmatprep.mubr.bf16.mxu0 0
  %406 = vmatmul.mubr.bf16.gmra.mxu0 %v372
  %v407 = vpop.f32.mrf.mxu0
  %v408 = vadd.f32 0.0, %v407
  %v409 = vpop.f32.mrf.mxu0
  %v410 = vadd.f32 0.0, %v409
  %v411 = vpop.f32.mrf.mxu0
  %v412 = vpop.f32.mrf.mxu0
  %413 = vdwg.mxu0
  %v414 = vadd.f32 %v408, %v48
  %v415 = vxor.u32 %v414, 2147483648
  %v416 = vmul.f32 %v415, 1.442695
  %v417 = vpow.pop %v416
  %v418 = vadd.f32 %v417, 1.0
  %v419 = vrcp.pop %v418
  %v420 = vmul.f32 1.0, %v419
  %v421 = vtanh.pop %v414
  %v422 = vmul.f32 %v420, %v343
  %423 = vrot.lane.b32.xlu0 %v420, 32
  %v424 = vpop.permute.xlu0 %423
  %425 = vrot.lane.b32.xlu0 %v421, 96
  %v426 = vpop.permute.xlu0 %425
  %v427 = vmul.f32 %v424, %v426
  %v428 = vadd.f32 %v422, %v427
  %429 = vrot.lane.b32.xlu0 %v420, 64
  %v430 = vpop.permute.xlu0 %429
  %v431 = vtanh.pop %v428
  %v432 = vmul.f32 %v430, %v431
  %v433 = vsel %vm52, %v370, %v432
  %s434 = scalar_lea.vmem [#allocation3], 8
  %435 = vst [vmem:[%s434] sm:$0xff] %v433
  %s436 = scalar_lea.vmem [#allocation2], 16
  %v437 = vld [vmem:[%s436] sm:$0xff]
  %v438 = vadd.f32 %v410, %v437
  %v439 = vxor.u32 %v438, 2147483648
  %v440 = vmul.f32 %v439, 1.442695
  %v441 = vpow.pop %v440
  %v442 = vadd.f32 %v441, 1.0
  %v443 = vrcp.pop %v442
  %v444 = vmul.f32 1.0, %v443
  %v445 = vtanh.pop %v438
  %446 = vrot.lane.b32.xlu0 %v444, 96
  %v447 = vpop.permute.xlu0 %446
  %v448 = vmul.f32 %v447, %v366
  %449 = vrot.lane.b32.xlu0 %v445, 64
  %v450 = vpop.permute.xlu0 %449
  %v451 = vmul.f32 %v444, %v450
  %v452 = vadd.f32 %v448, %v451
  %453 = vrot.lane.b32.xlu0 %v444, 32
  %v454 = vpop.permute.xlu0 %453
  %v455 = vtanh.pop %v452
  %v456 = vmul.f32 %v454, %v455
  %v457 = vsel %vm52, %v456, %v432
  %v458 = vpack.c.bf16 %v457, %v457
  %459 = vmatprep.subr.bf16.mxu0 %v271
  %460 = vmatpush1.bf16.msra.mxu0 %v270
  %461 = vmatprep.subr.bf16.mxu0 %v269
  %462 = vmatpush1.bf16.msra.mxu0 %v268
  %463 = vmatprep.subr.bf16.mxu0 %v267
  %464 = vmatpush1.bf16.msra.mxu0 %v266
  %465 = vmatprep.subr.bf16.mxu0 %v265
  %466 = vmatpush1.bf16.msra.mxu0 %v264
  %467 = vmatprep.subr.bf16.mxu0 %v263
  %468 = vmatpush1.bf16.msra.mxu0 %v262
  %469 = vmatprep.subr.bf16.mxu0 %v261
  %470 = vmatpush1.bf16.msra.mxu0 %v260
  %471 = vmatprep.subr.bf16.mxu0 %v259
  %472 = vmatpush1.bf16.msra.mxu0 %v258
  %473 = vmatprep.subr.bf16.mxu0 %v257
  %474 = vmatpush1.bf16.msra.mxu0 %v256
  %475 = vmatprep.subr.bf16.mxu0 0
  %476 = vmatpush2.bf16.msra.mxu0 0
  %477 = vmatprep.subr.bf16.mxu0 0
  %478 = vmatpush2.bf16.msra.mxu0 0
  %479 = vmatprep.subr.bf16.mxu0 0
  %480 = vmatpush2.bf16.msra.mxu0 0
  %481 = vmatprep.subr.bf16.mxu0 0
  %482 = vmatpush2.bf16.msra.mxu0 0
  %483 = vmatprep.subr.bf16.mxu0 0
  %484 = vmatpush2.bf16.msra.mxu0 0
  %485 = vmatprep.subr.bf16.mxu0 0
  %486 = vmatpush2.bf16.msra.mxu0 0
  %487 = vmatprep.subr.bf16.mxu0 0
  %488 = vmatpush2.bf16.msra.mxu0 0
  %489 = vmatprep.subr.bf16.mxu0 0
  %490 = vmatpush2.bf16.msra.mxu0 0
  %491 = vmatprep.mubr.bf16.mxu0 0
  %492 = vmatmul.mubr.bf16.gmra.mxu0 %v458
  %v493 = vpop.f32.mrf.mxu0
  %v494 = vadd.f32 0.0, %v493
  %v495 = vpop.f32.mrf.mxu0
  %v496 = vadd.f32 0.0, %v495
  %v497 = vpop.f32.mrf.mxu0
  %v498 = vpop.f32.mrf.mxu0
  %499 = vdwg.mxu0
  %v500 = vadd.f32 %v494, %v48
  %v501 = vxor.u32 %v500, 2147483648
  %v502 = vmul.f32 %v501, 1.442695
  %v503 = vpow.pop %v502
  %v504 = vadd.f32 %v503, 1.0
  %v505 = vrcp.pop %v504
  %v506 = vmul.f32 1.0, %v505
  %v507 = vtanh.pop %v500
  %v508 = vmul.f32 %v506, %v428
  %509 = vrot.lane.b32.xlu0 %v506, 32
  %v510 = vpop.permute.xlu0 %509
  %511 = vrot.lane.b32.xlu0 %v507, 96
  %v512 = vpop.permute.xlu0 %511
  %v513 = vmul.f32 %v510, %v512
  %v514 = vadd.f32 %v508, %v513
  %515 = vrot.lane.b32.xlu0 %v506, 64
  %v516 = vpop.permute.xlu0 %515
  %v517 = vtanh.pop %v514
  %v518 = vmul.f32 %v516, %v517
  %v519 = vsel %vm52, %v456, %v518
  %s520 = scalar_lea.vmem [#allocation3], 16
  %521 = vst [vmem:[%s520] sm:$0xff] %v519
  %s522 = scalar_lea.vmem [#allocation2], 24
  %v523 = vld [vmem:[%s522] sm:$0xff]
  %v524 = vadd.f32 %v496, %v523
  %v525 = vxor.u32 %v524, 2147483648
  %v526 = vmul.f32 %v525, 1.442695
  %v527 = vpow.pop %v526
  %v528 = vadd.f32 %v527, 1.0
  %v529 = vrcp.pop %v528
  %v530 = vmul.f32 1.0, %v529
  %v531 = vtanh.pop %v524
  %532 = vrot.lane.b32.xlu0 %v530, 96
  %v533 = vpop.permute.xlu0 %532
  %v534 = vmul.f32 %v533, %v452
  %535 = vrot.lane.b32.xlu0 %v531, 64
  %v536 = vpop.permute.xlu0 %535
  %v537 = vmul.f32 %v530, %v536
  %v538 = vadd.f32 %v534, %v537
  %539 = vrot.lane.b32.xlu0 %v530, 32
  %v540 = vpop.permute.xlu0 %539
  %v541 = vtanh.pop %v538
  %v542 = vmul.f32 %v540, %v541
  %v543 = vsel %vm52, %v542, %v518
  %v544 = vpack.c.bf16 %v543, %v543
  %545 = vmatprep.subr.bf16.mxu0 %v271
  %546 = vmatpush1.bf16.msra.mxu0 %v270
  %547 = vmatprep.subr.bf16.mxu0 %v269
  %548 = vmatpush1.bf16.msra.mxu0 %v268
  %549 = vmatprep.subr.bf16.mxu0 %v267
  %550 = vmatpush1.bf16.msra.mxu0 %v266
  %551 = vmatprep.subr.bf16.mxu0 %v265
  %552 = vmatpush1.bf16.msra.mxu0 %v264
  %553 = vmatprep.subr.bf16.mxu0 %v263
  %554 = vmatpush1.bf16.msra.mxu0 %v262
  %555 = vmatprep.subr.bf16.mxu0 %v261
  %556 = vmatpush1.bf16.msra.mxu0 %v260
  %557 = vmatprep.subr.bf16.mxu0 %v259
  %558 = vmatpush1.bf16.msra.mxu0 %v258
  %559 = vmatprep.subr.bf16.mxu0 %v257
  %560 = vmatpush1.bf16.msra.mxu0 %v256
  %561 = vmatprep.subr.bf16.mxu0 0
  %562 = vmatpush2.bf16.msra.mxu0 0
  %563 = vmatprep.subr.bf16.mxu0 0
  %564 = vmatpush2.bf16.msra.mxu0 0
  %565 = vmatprep.subr.bf16.mxu0 0
  %566 = vmatpush2.bf16.msra.mxu0 0
  %567 = vmatprep.subr.bf16.mxu0 0
  %568 = vmatpush2.bf16.msra.mxu0 0
  %569 = vmatprep.subr.bf16.mxu0 0
  %570 = vmatpush2.bf16.msra.mxu0 0
  %571 = vmatprep.subr.bf16.mxu0 0
  %572 = vmatpush2.bf16.msra.mxu0 0
  %573 = vmatprep.subr.bf16.mxu0 0
  %574 = vmatpush2.bf16.msra.mxu0 0
  %575 = vmatprep.subr.bf16.mxu0 0
  %576 = vmatpush2.bf16.msra.mxu0 0
  %577 = vmatprep.mubr.bf16.mxu0 0
  %578 = vmatmul.mubr.bf16.gmra.mxu0 %v544
  %v579 = vpop.f32.mrf.mxu0
  %v580 = vadd.f32 0.0, %v579
  %v581 = vpop.f32.mrf.mxu0
  %v582 = vadd.f32 0.0, %v581
  %v583 = vpop.f32.mrf.mxu0
  %v584 = vpop.f32.mrf.mxu0
  %585 = vdwg.mxu0
  %v586 = vadd.f32 %v580, %v48
  %v587 = vxor.u32 %v586, 2147483648
  %v588 = vmul.f32 %v587, 1.442695
  %v589 = vpow.pop %v588
  %v590 = vadd.f32 %v589, 1.0
  %v591 = vrcp.pop %v590
  %v592 = vmul.f32 1.0, %v591
  %v593 = vtanh.pop %v586
  %v594 = vmul.f32 %v592, %v514
  %595 = vrot.lane.b32.xlu0 %v592, 32
  %v596 = vpop.permute.xlu0 %595
  %597 = vrot.lane.b32.xlu0 %v593, 96
  %v598 = vpop.permute.xlu0 %597
  %v599 = vmul.f32 %v596, %v598
  %v600 = vadd.f32 %v594, %v599
  %601 = vrot.lane.b32.xlu0 %v592, 64
  %v602 = vpop.permute.xlu0 %601
  %v603 = vtanh.pop %v600
  %v604 = vmul.f32 %v602, %v603
  %v605 = vsel %vm52, %v542, %v604
  %s606 = scalar_lea.vmem [#allocation3], 24
  %607 = vst [vmem:[%s606] sm:$0xff] %v605
  %s608 = scalar_lea.vmem [#allocation2], 32
  %v609 = vld [vmem:[%s608] sm:$0xff]
  %v610 = vadd.f32 %v582, %v609
  %v611 = vxor.u32 %v610, 2147483648
  %v612 = vmul.f32 %v611, 1.442695
  %v613 = vpow.pop %v612
  %v614 = vadd.f32 %v613, 1.0
  %v615 = vrcp.pop %v614
  %v616 = vmul.f32 1.0, %v615
  %v617 = vtanh.pop %v610
  %618 = vrot.lane.b32.xlu0 %v616, 96
  %v619 = vpop.permute.xlu0 %618
  %v620 = vmul.f32 %v619, %v538
  %621 = vrot.lane.b32.xlu0 %v617, 64
  %v622 = vpop.permute.xlu0 %621
  %v623 = vmul.f32 %v616, %v622
  %v624 = vadd.f32 %v620, %v623
  %625 = vrot.lane.b32.xlu0 %v616, 32
  %v626 = vpop.permute.xlu0 %625
  %v627 = vtanh.pop %v624
  %v628 = vmul.f32 %v626, %v627
  %v629 = vsel %vm52, %v628, %v604
  %v630 = vpack.c.bf16 %v629, %v629
  %631 = vmatprep.subr.bf16.mxu0 %v271
  %632 = vmatpush1.bf16.msra.mxu0 %v270
  %633 = vmatprep.subr.bf16.mxu0 %v269
  %634 = vmatpush1.bf16.msra.mxu0 %v268
  %635 = vmatprep.subr.bf16.mxu0 %v267
  %636 = vmatpush1.bf16.msra.mxu0 %v266
  %637 = vmatprep.subr.bf16.mxu0 %v265
  %638 = vmatpush1.bf16.msra.mxu0 %v264
  %639 = vmatprep.subr.bf16.mxu0 %v263
  %640 = vmatpush1.bf16.msra.mxu0 %v262
  %641 = vmatprep.subr.bf16.mxu0 %v261
  %642 = vmatpush1.bf16.msra.mxu0 %v260
  %643 = vmatprep.subr.bf16.mxu0 %v259
  %644 = vmatpush1.bf16.msra.mxu0 %v258
  %645 = vmatprep.subr.bf16.mxu0 %v257
  %646 = vmatpush1.bf16.msra.mxu0 %v256
  %647 = vmatprep.subr.bf16.mxu0 0
  %648 = vmatpush2.bf16.msra.mxu0 0
  %649 = vmatprep.subr.bf16.mxu0 0
  %650 = vmatpush2.bf16.msra.mxu0 0
  %651 = vmatprep.subr.bf16.mxu0 0
  %652 = vmatpush2.bf16.msra.mxu0 0
  %653 = vmatprep.subr.bf16.mxu0 0
  %654 = vmatpush2.bf16.msra.mxu0 0
  %655 = vmatprep.subr.bf16.mxu0 0
  %656 = vmatpush2.bf16.msra.mxu0 0
  %657 = vmatprep.subr.bf16.mxu0 0
  %658 = vmatpush2.bf16.msra.mxu0 0
  %659 = vmatprep.subr.bf16.mxu0 0
  %660 = vmatpush2.bf16.msra.mxu0 0
  %661 = vmatprep.subr.bf16.mxu0 0
  %662 = vmatpush2.bf16.msra.mxu0 0
  %663 = vmatprep.mubr.bf16.mxu0 0
  %664 = vmatmul.mubr.bf16.gmra.mxu0 %v630
  %v665 = vpop.f32.mrf.mxu0
  %v666 = vadd.f32 0.0, %v665
  %v667 = vpop.f32.mrf.mxu0
  %v668 = vadd.f32 0.0, %v667
  %v669 = vpop.f32.mrf.mxu0
  %v670 = vpop.f32.mrf.mxu0
  %671 = vdwg.mxu0
  %v672 = vadd.f32 %v666, %v48
  %v673 = vxor.u32 %v672, 2147483648
  %v674 = vmul.f32 %v673, 1.442695
  %v675 = vpow.pop %v674
  %v676 = vadd.f32 %v675, 1.0
  %v677 = vrcp.pop %v676
  %v678 = vmul.f32 1.0, %v677
  %v679 = vtanh.pop %v672
  %v680 = vmul.f32 %v678, %v600
  %681 = vrot.lane.b32.xlu0 %v678, 32
  %v682 = vpop.permute.xlu0 %681
  %683 = vrot.lane.b32.xlu0 %v679, 96
  %v684 = vpop.permute.xlu0 %683
  %v685 = vmul.f32 %v682, %v684
  %v686 = vadd.f32 %v680, %v685
  %687 = vrot.lane.b32.xlu0 %v678, 64
  %v688 = vpop.permute.xlu0 %687
  %v689 = vtanh.pop %v686
  %v690 = vmul.f32 %v688, %v689
  %v691 = vsel %vm52, %v628, %v690
  %s692 = scalar_lea.vmem [#allocation3], 32
  %693 = vst [vmem:[%s692] sm:$0xff] %v691
  %s694 = scalar_lea.vmem [#allocation2], 40
  %v695 = vld [vmem:[%s694] sm:$0xff]
  %v696 = vadd.f32 %v668, %v695
  %v697 = vxor.u32 %v696, 2147483648
  %v698 = vmul.f32 %v697, 1.442695
  %v699 = vpow.pop %v698
  %v700 = vadd.f32 %v699, 1.0
  %v701 = vrcp.pop %v700
  %v702 = vmul.f32 1.0, %v701
  %v703 = vtanh.pop %v696
  %704 = vrot.lane.b32.xlu0 %v702, 96
  %v705 = vpop.permute.xlu0 %704
  %v706 = vmul.f32 %v705, %v624
  %707 = vrot.lane.b32.xlu0 %v703, 64
  %v708 = vpop.permute.xlu0 %707
  %v709 = vmul.f32 %v702, %v708
  %v710 = vadd.f32 %v706, %v709
  %711 = vrot.lane.b32.xlu0 %v702, 32
  %v712 = vpop.permute.xlu0 %711
  %v713 = vtanh.pop %v710
  %v714 = vmul.f32 %v712, %v713
  %v715 = vsel %vm52, %v714, %v690
  %v716 = vpack.c.bf16 %v715, %v715
  %717 = vmatprep.subr.bf16.mxu0 %v271
  %718 = vmatpush1.bf16.msra.mxu0 %v270
  %719 = vmatprep.subr.bf16.mxu0 %v269
  %720 = vmatpush1.bf16.msra.mxu0 %v268
  %721 = vmatprep.subr.bf16.mxu0 %v267
  %722 = vmatpush1.bf16.msra.mxu0 %v266
  %723 = vmatprep.subr.bf16.mxu0 %v265
  %724 = vmatpush1.bf16.msra.mxu0 %v264
  %725 = vmatprep.subr.bf16.mxu0 %v263
  %726 = vmatpush1.bf16.msra.mxu0 %v262
  %727 = vmatprep.subr.bf16.mxu0 %v261
  %728 = vmatpush1.bf16.msra.mxu0 %v260
  %729 = vmatprep.subr.bf16.mxu0 %v259
  %730 = vmatpush1.bf16.msra.mxu0 %v258
  %731 = vmatprep.subr.bf16.mxu0 %v257
  %732 = vmatpush1.bf16.msra.mxu0 %v256
  %733 = vmatprep.subr.bf16.mxu0 0
  %734 = vmatpush2.bf16.msra.mxu0 0
  %735 = vmatprep.subr.bf16.mxu0 0
  %736 = vmatpush2.bf16.msra.mxu0 0
  %737 = vmatprep.subr.bf16.mxu0 0
  %738 = vmatpush2.bf16.msra.mxu0 0
  %739 = vmatprep.subr.bf16.mxu0 0
  %740 = vmatpush2.bf16.msra.mxu0 0
  %741 = vmatprep.subr.bf16.mxu0 0
  %742 = vmatpush2.bf16.msra.mxu0 0
  %743 = vmatprep.subr.bf16.mxu0 0
  %744 = vmatpush2.bf16.msra.mxu0 0
  %745 = vmatprep.subr.bf16.mxu0 0
  %746 = vmatpush2.bf16.msra.mxu0 0
  %747 = vmatprep.subr.bf16.mxu0 0
  %748 = vmatpush2.bf16.msra.mxu0 0
  %749 = vmatprep.mubr.bf16.mxu0 0
  %750 = vmatmul.mubr.bf16.gmra.mxu0 %v716
  %v751 = vpop.f32.mrf.mxu0
  %v752 = vadd.f32 0.0, %v751
  %v753 = vpop.f32.mrf.mxu0
  %v754 = vadd.f32 0.0, %v753
  %v755 = vpop.f32.mrf.mxu0
  %v756 = vpop.f32.mrf.mxu0
  %757 = vdwg.mxu0
  %v758 = vadd.f32 %v752, %v48
  %v759 = vxor.u32 %v758, 2147483648
  %v760 = vmul.f32 %v759, 1.442695
  %v761 = vpow.pop %v760
  %v762 = vadd.f32 %v761, 1.0
  %v763 = vrcp.pop %v762
  %v764 = vmul.f32 1.0, %v763
  %v765 = vtanh.pop %v758
  %v766 = vmul.f32 %v764, %v686
  %767 = vrot.lane.b32.xlu0 %v764, 32
  %v768 = vpop.permute.xlu0 %767
  %769 = vrot.lane.b32.xlu0 %v765, 96
  %v770 = vpop.permute.xlu0 %769
  %v771 = vmul.f32 %v768, %v770
  %v772 = vadd.f32 %v766, %v771
  %773 = vrot.lane.b32.xlu0 %v764, 64
  %v774 = vpop.permute.xlu0 %773
  %v775 = vtanh.pop %v772
  %v776 = vmul.f32 %v774, %v775
  %v777 = vsel %vm52, %v714, %v776
  %s778 = scalar_lea.vmem [#allocation3], 40
  %779 = vst [vmem:[%s778] sm:$0xff] %v777
  %s780 = scalar_lea.vmem [#allocation2], 48
  %v781 = vld [vmem:[%s780] sm:$0xff]
  %v782 = vadd.f32 %v754, %v781
  %v783 = vxor.u32 %v782, 2147483648
  %v784 = vmul.f32 %v783, 1.442695
  %v785 = vpow.pop %v784
  %v786 = vadd.f32 %v785, 1.0
  %v787 = vrcp.pop %v786
  %v788 = vmul.f32 1.0, %v787
  %v789 = vtanh.pop %v782
  %790 = vrot.lane.b32.xlu0 %v788, 96
  %v791 = vpop.permute.xlu0 %790
  %v792 = vmul.f32 %v791, %v710
  %793 = vrot.lane.b32.xlu0 %v789, 64
  %v794 = vpop.permute.xlu0 %793
  %v795 = vmul.f32 %v788, %v794
  %v796 = vadd.f32 %v792, %v795
  %797 = vrot.lane.b32.xlu0 %v788, 32
  %v798 = vpop.permute.xlu0 %797
  %v799 = vtanh.pop %v796
  %v800 = vmul.f32 %v798, %v799
  %v801 = vsel %vm52, %v800, %v776
  %v802 = vpack.c.bf16 %v801, %v801
  %803 = vmatprep.subr.bf16.mxu0 %v271
  %804 = vmatpush1.bf16.msra.mxu0 %v270
  %805 = vmatprep.subr.bf16.mxu0 %v269
  %806 = vmatpush1.bf16.msra.mxu0 %v268
  %807 = vmatprep.subr.bf16.mxu0 %v267
  %808 = vmatpush1.bf16.msra.mxu0 %v266
  %809 = vmatprep.subr.bf16.mxu0 %v265
  %810 = vmatpush1.bf16.msra.mxu0 %v264
  %811 = vmatprep.subr.bf16.mxu0 %v263
  %812 = vmatpush1.bf16.msra.mxu0 %v262
  %813 = vmatprep.subr.bf16.mxu0 %v261
  %814 = vmatpush1.bf16.msra.mxu0 %v260
  %815 = vmatprep.subr.bf16.mxu0 %v259
  %816 = vmatpush1.bf16.msra.mxu0 %v258
  %817 = vmatprep.subr.bf16.mxu0 %v257
  %818 = vmatpush1.bf16.msra.mxu0 %v256
  %819 = vmatprep.subr.bf16.mxu0 0
  %820 = vmatpush2.bf16.msra.mxu0 0
  %821 = vmatprep.subr.bf16.mxu0 0
  %822 = vmatpush2.bf16.msra.mxu0 0
  %823 = vmatprep.subr.bf16.mxu0 0
  %824 = vmatpush2.bf16.msra.mxu0 0
  %825 = vmatprep.subr.bf16.mxu0 0
  %826 = vmatpush2.bf16.msra.mxu0 0
  %827 = vmatprep.subr.bf16.mxu0 0
  %828 = vmatpush2.bf16.msra.mxu0 0
  %829 = vmatprep.subr.bf16.mxu0 0
  %830 = vmatpush2.bf16.msra.mxu0 0
  %831 = vmatprep.subr.bf16.mxu0 0
  %832 = vmatpush2.bf16.msra.mxu0 0
  %833 = vmatprep.subr.bf16.mxu0 0
  %834 = vmatpush2.bf16.msra.mxu0 0
  %835 = vmatprep.mubr.bf16.mxu0 0
  %836 = vmatmul.mubr.bf16.gmra.mxu0 %v802
  %v837 = vpop.f32.mrf.mxu0
  %v838 = vadd.f32 0.0, %v837
  %v839 = vpop.f32.mrf.mxu0
  %v840 = vadd.f32 0.0, %v839
  %v841 = vpop.f32.mrf.mxu0
  %v842 = vpop.f32.mrf.mxu0
  %843 = vdwg.mxu0
  %v844 = vadd.f32 %v838, %v48
  %v845 = vxor.u32 %v844, 2147483648
  %v846 = vmul.f32 %v845, 1.442695
  %v847 = vpow.pop %v846
  %v848 = vadd.f32 %v847, 1.0
  %v849 = vrcp.pop %v848
  %v850 = vmul.f32 1.0, %v849
  %v851 = vtanh.pop %v844
  %v852 = vmul.f32 %v850, %v772
  %853 = vrot.lane.b32.xlu0 %v850, 32
  %v854 = vpop.permute.xlu0 %853
  %855 = vrot.lane.b32.xlu0 %v851, 96
  %v856 = vpop.permute.xlu0 %855
  %v857 = vmul.f32 %v854, %v856
  %v858 = vadd.f32 %v852, %v857
  %859 = vrot.lane.b32.xlu0 %v850, 64
  %v860 = vpop.permute.xlu0 %859
  %v861 = vtanh.pop %v858
  %v862 = vmul.f32 %v860, %v861
  %v863 = vsel %vm52, %v800, %v862
  %s864 = scalar_lea.vmem [#allocation3], 48
  %865 = vst [vmem:[%s864] sm:$0xff] %v863
  %s866 = scalar_lea.vmem [#allocation2], 56
  %v867 = vld [vmem:[%s866] sm:$0xff]
  %v868 = vadd.f32 %v840, %v867
  %v869 = vxor.u32 %v868, 2147483648
  %v870 = vmul.f32 %v869, 1.442695
  %v871 = vpow.pop %v870
  %v872 = vadd.f32 %v871, 1.0
  %v873 = vrcp.pop %v872
  %v874 = vmul.f32 1.0, %v873
  %v875 = vtanh.pop %v868
  %876 = vrot.lane.b32.xlu0 %v874, 96
  %v877 = vpop.permute.xlu0 %876
  %v878 = vmul.f32 %v877, %v796
  %879 = vrot.lane.b32.xlu0 %v875, 64
  %v880 = vpop.permute.xlu0 %879
  %v881 = vmul.f32 %v874, %v880
  %v882 = vadd.f32 %v878, %v881
  %883 = vrot.lane.b32.xlu0 %v874, 32
  %v884 = vpop.permute.xlu0 %883
  %v885 = vtanh.pop %v882
  %v886 = vmul.f32 %v884, %v885
  %v887 = vsel %vm52, %v886, %v862
  %v888 = vpack.c.bf16 %v887, %v887
  %889 = vmatprep.subr.bf16.mxu0 %v271
  %890 = vmatpush1.bf16.msra.mxu0 %v270
  %891 = vmatprep.subr.bf16.mxu0 %v269
  %892 = vmatpush1.bf16.msra.mxu0 %v268
  %893 = vmatprep.subr.bf16.mxu0 %v267
  %894 = vmatpush1.bf16.msra.mxu0 %v266
  %895 = vmatprep.subr.bf16.mxu0 %v265
  %896 = vmatpush1.bf16.msra.mxu0 %v264
  %897 = vmatprep.subr.bf16.mxu0 %v263
  %898 = vmatpush1.bf16.msra.mxu0 %v262
  %899 = vmatprep.subr.bf16.mxu0 %v261
  %900 = vmatpush1.bf16.msra.mxu0 %v260
  %901 = vmatprep.subr.bf16.mxu0 %v259
  %902 = vmatpush1.bf16.msra.mxu0 %v258
  %903 = vmatprep.subr.bf16.mxu0 %v257
  %904 = vmatpush1.bf16.msra.mxu0 %v256
  %905 = vmatprep.subr.bf16.mxu0 0
  %906 = vmatpush2.bf16.msra.mxu0 0
  %907 = vmatprep.subr.bf16.mxu0 0
  %908 = vmatpush2.bf16.msra.mxu0 0
  %909 = vmatprep.subr.bf16.mxu0 0
  %910 = vmatpush2.bf16.msra.mxu0 0
  %911 = vmatprep.subr.bf16.mxu0 0
  %912 = vmatpush2.bf16.msra.mxu0 0
  %913 = vmatprep.subr.bf16.mxu0 0
  %914 = vmatpush2.bf16.msra.mxu0 0
  %915 = vmatprep.subr.bf16.mxu0 0
  %916 = vmatpush2.bf16.msra.mxu0 0
  %917 = vmatprep.subr.bf16.mxu0 0
  %918 = vmatpush2.bf16.msra.mxu0 0
  %919 = vmatprep.subr.bf16.mxu0 0
  %920 = vmatpush2.bf16.msra.mxu0 0
  %921 = vmatprep.mubr.bf16.mxu0 0
  %922 = vmatmul.mubr.bf16.gmra.mxu0 %v888
  %v923 = vpop.f32.mrf.mxu0
  %v924 = vadd.f32 0.0, %v923
  %v925 = vpop.f32.mrf.mxu0
  %v926 = vpop.f32.mrf.mxu0
  %v927 = vpop.f32.mrf.mxu0
  %928 = vdwg.mxu0
  %v929 = vadd.f32 %v924, %v48
  %v930 = vxor.u32 %v929, 2147483648
  %v931 = vmul.f32 %v930, 1.442695
  %v932 = vpow.pop %v931
  %v933 = vadd.f32 %v932, 1.0
  %v934 = vrcp.pop %v933
  %v935 = vmul.f32 1.0, %v934
  %v936 = vtanh.pop %v929
  %v937 = vmul.f32 %v935, %v858
  %938 = vrot.lane.b32.xlu0 %v935, 32
  %v939 = vpop.permute.xlu0 %938
  %940 = vrot.lane.b32.xlu0 %v936, 96
  %v941 = vpop.permute.xlu0 %940
  %v942 = vmul.f32 %v939, %v941
  %v943 = vadd.f32 %v937, %v942
  %944 = vrot.lane.b32.xlu0 %v935, 64
  %v945 = vpop.permute.xlu0 %944
  %v946 = vtanh.pop %v943
  %v947 = vmul.f32 %v945, %v946
  %v948 = vsel %vm52, %v886, %v947
  %s949 = scalar_lea.vmem [#allocation3], 56
  %950 = vst [vmem:[%s949] sm:$0xff] %v948
  %v951 = vld [vmem:[#allocation3] sm:$0xff]
  %v952 = vld [vmem:[#allocation3 + $0x8] sm:$0xff]
  %v953 = vld [vmem:[#allocation3 + $0x10] sm:$0xff]
  %v954 = vld [vmem:[#allocation3 + $0x18] sm:$0xff]
  %v955 = vld [vmem:[#allocation3 + $0x20] sm:$0xff]
  %v956 = vld [vmem:[#allocation3 + $0x28] sm:$0xff]
  %v957 = vld [vmem:[#allocation3 + $0x30] sm:$0xff]
  %v958 = vld [vmem:[#allocation3 + $0x38] sm:$0xff]
  %v959 = vld [vmem:[%s5] sm:$0xff]
  %v960 = vld [vmem:[%s5 + $0x8] sm:$0xff]
  %v961 = vld [vmem:[%s5 + $0x10] sm:$0xff]
  %v962 = vld [vmem:[%s5 + $0x18] sm:$0xff]
  %v963 = vld [vmem:[%s5 + $0x20] sm:$0xff]
  %v964 = vld [vmem:[%s5 + $0x28] sm:$0xff]
  %v965 = vld [vmem:[%s5 + $0x30] sm:$0xff]
  %v966 = vld [vmem:[%s5 + $0x38] sm:$0xff]
  %v967 = vld [vmem:[%s5 + $0x40] sm:$0xff]
  %v968 = vld [vmem:[%s5 + $0x48] sm:$0xff]
  %v969 = vld [vmem:[%s5 + $0x50] sm:$0xff]
  %v970 = vld [vmem:[%s5 + $0x58] sm:$0xff]
  %v971 = vld [vmem:[%s5 + $0x60] sm:$0xff]
  %v972 = vld [vmem:[%s5 + $0x68] sm:$0xff]
  %v973 = vld [vmem:[%s5 + $0x70] sm:$0xff]
  %v974 = vld [vmem:[%s5 + $0x78] sm:$0xff]
  %v975 = vld [vmem:[%s6] sm:$0x1]
  %v977 = vlaneseq
  %v978 = vshrl.u32 %v977, 7
  %v979 = vsub.s32 0, %v978
  %v980 = vrot.slane %v975, %v979
  %982 = vmatprep.subr.mxu0 0.0
  %983 = vmatpush1.msra.mxu0 %v974
  %984 = vmatprep.subr.mxu0 0.0
  %985 = vmatpush1.msra.mxu0 %v973
  %986 = vmatprep.subr.mxu0 0.0
  %987 = vmatpush1.msra.mxu0 %v972
  %988 = vmatprep.subr.mxu0 0.0
  %989 = vmatpush1.msra.mxu0 %v971
  %990 = vmatprep.subr.mxu0 0.0
  %991 = vmatpush1.msra.mxu0 %v970
  %992 = vmatprep.subr.mxu0 0.0
  %993 = vmatpush1.msra.mxu0 %v969
  %994 = vmatprep.subr.mxu0 0.0
  %995 = vmatpush1.msra.mxu0 %v968
  %996 = vmatprep.subr.mxu0 0.0
  %997 = vmatpush1.msra.mxu0 %v967
  %998 = vmatprep.subr.mxu0 0.0
  %999 = vmatpush1.msra.mxu0 %v966
  %1000 = vmatprep.subr.mxu0 0.0
  %1001 = vmatpush1.msra.mxu0 %v965
  %1002 = vmatprep.subr.mxu0 0.0
  %1003 = vmatpush1.msra.mxu0 %v964
  %1004 = vmatprep.subr.mxu0 0.0
  %1005 = vmatpush1.msra.mxu0 %v963
  %1006 = vmatprep.subr.mxu0 0.0
  %1007 = vmatpush1.msra.mxu0 %v962
  %1008 = vmatprep.subr.mxu0 0.0
  %1009 = vmatpush1.msra.mxu0 %v961
  %1010 = vmatprep.subr.mxu0 0.0
  %1011 = vmatpush1.msra.mxu0 %v960
  %1012 = vmatprep.subr.mxu0 0.0
  %1013 = vmatpush1.msra.mxu0 %v959
  %1014 = vmatprep.subr.mxu0 0.0
  %1015 = vmatpush2.msra.mxu0 0.0
  %1016 = vmatprep.subr.mxu0 0.0
  %1017 = vmatpush2.msra.mxu0 0.0
  %1018 = vmatprep.subr.mxu0 0.0
  %1019 = vmatpush2.msra.mxu0 0.0
  %1020 = vmatprep.subr.mxu0 0.0
  %1021 = vmatpush2.msra.mxu0 0.0
  %1022 = vmatprep.subr.mxu0 0.0
  %1023 = vmatpush2.msra.mxu0 0.0
  %1024 = vmatprep.subr.mxu0 0.0
  %1025 = vmatpush2.msra.mxu0 0.0
  %1026 = vmatprep.subr.mxu0 0.0
  %1027 = vmatpush2.msra.mxu0 0.0
  %1028 = vmatprep.subr.mxu0 0.0
  %1029 = vmatpush2.msra.mxu0 0.0
  %1030 = vmatprep.subr.mxu0 0.0
  %1031 = vmatpush2.msra.mxu0 0.0
  %1032 = vmatprep.subr.mxu0 0.0
  %1033 = vmatpush2.msra.mxu0 0.0
  %1034 = vmatprep.subr.mxu0 0.0
  %1035 = vmatpush2.msra.mxu0 0.0
  %1036 = vmatprep.subr.mxu0 0.0
  %1037 = vmatpush2.msra.mxu0 0.0
  %1038 = vmatprep.subr.mxu0 0.0
  %1039 = vmatpush2.msra.mxu0 0.0
  %1040 = vmatprep.subr.mxu0 0.0
  %1041 = vmatpush2.msra.mxu0 0.0
  %1042 = vmatprep.subr.mxu0 0.0
  %1043 = vmatpush2.msra.mxu0 0.0
  %1044 = vmatprep.subr.mxu0 0.0
  %1045 = vmatpush2.msra.mxu0 0.0
  %1046 = vmatprep.mubr.f32.mxu0 0.0
  %1047 = vmatmul.mubr.f32.gmra.mxu0 %v951
  %v1048 = vpop.f32.mrf.mxu0
  %v1049 = vadd.f32 %v980, %v1048
  %v1050 = vpop.f32.mrf.mxu0
  %1051 = vmatprep.mubr.f32.mxu0 0.0
  %1052 = vmatmul.mubr.f32.gmra.mxu0 %v952
  %v1053 = vpop.f32.mrf.mxu0
  %v1054 = vadd.f32 %v980, %v1053
  %v1055 = vpop.f32.mrf.mxu0
  %1056 = vmatprep.mubr.f32.mxu0 0.0
  %1057 = vmatmul.mubr.f32.gmra.mxu0 %v953
  %v1058 = vpop.f32.mrf.mxu0
  %v1059 = vadd.f32 %v980, %v1058
  %v1060 = vpop.f32.mrf.mxu0
  %1061 = vmatprep.mubr.f32.mxu0 0.0
  %1062 = vmatmul.mubr.f32.gmra.mxu0 %v954
  %v1063 = vpop.f32.mrf.mxu0
  %v1064 = vadd.f32 %v980, %v1063
  %v1065 = vpop.f32.mrf.mxu0
  %1066 = vmatprep.mubr.f32.mxu0 0.0
  %1067 = vmatmul.mubr.f32.gmra.mxu0 %v955
  %v1068 = vpop.f32.mrf.mxu0
  %v1069 = vadd.f32 %v980, %v1068
  %v1070 = vpop.f32.mrf.mxu0
  %1071 = vmatprep.mubr.f32.mxu0 0.0
  %1072 = vmatmul.mubr.f32.gmra.mxu0 %v956
  %v1073 = vpop.f32.mrf.mxu0
  %v1074 = vadd.f32 %v980, %v1073
  %v1075 = vpop.f32.mrf.mxu0
  %1076 = vmatprep.mubr.f32.mxu0 0.0
  %1077 = vmatmul.mubr.f32.gmra.mxu0 %v957
  %v1078 = vpop.f32.mrf.mxu0
  %v1079 = vadd.f32 %v980, %v1078
  %v1080 = vpop.f32.mrf.mxu0
  %1081 = vmatprep.mubr.f32.mxu0 0.0
  %1082 = vmatmul.mubr.f32.gmra.mxu0 %v958
  %v1083 = vpop.f32.mrf.mxu0
  %v1084 = vadd.f32 %v980, %v1083
  %v1085 = vpop.f32.mrf.mxu0
  %1086 = vdwg.mxu0
  %v1087 = vxor.u32 %v1049, 2147483648
  %v1088 = vxor.u32 %v1054, 2147483648
  %v1089 = vxor.u32 %v1059, 2147483648
  %v1090 = vxor.u32 %v1064, 2147483648
  %v1091 = vxor.u32 %v1069, 2147483648
  %v1092 = vxor.u32 %v1074, 2147483648
  %v1093 = vxor.u32 %v1079, 2147483648
  %v1094 = vxor.u32 %v1084, 2147483648
  %v1095 = vmul.f32 %v1087, 1.442695
  %v1096 = vpow.pop %v1095
  %v1097 = vmul.f32 %v1088, 1.442695
  %v1098 = vpow.pop %v1097
  %v1099 = vmul.f32 %v1089, 1.442695
  %v1100 = vpow.pop %v1099
  %v1101 = vmul.f32 %v1090, 1.442695
  %v1102 = vpow.pop %v1101
  %v1103 = vmul.f32 %v1091, 1.442695
  %v1104 = vpow.pop %v1103
  %v1105 = vmul.f32 %v1092, 1.442695
  %v1106 = vpow.pop %v1105
  %v1107 = vmul.f32 %v1093, 1.442695
  %v1108 = vpow.pop %v1107
  %v1109 = vmul.f32 %v1094, 1.442695
  %v1110 = vpow.pop %v1109
  %v1111 = vadd.f32 %v1096, 1.0
  %v1112 = vadd.f32 %v1098, 1.0
  %v1113 = vadd.f32 %v1100, 1.0
  %v1114 = vadd.f32 %v1102, 1.0
  %v1115 = vadd.f32 %v1104, 1.0
  %v1116 = vadd.f32 %v1106, 1.0
  %v1117 = vadd.f32 %v1108, 1.0
  %v1118 = vadd.f32 %v1110, 1.0
  %v1119 = vrcp.pop %v1111
  %v1120 = vmul.f32 1.0, %v1119
  %v1121 = vrcp.pop %v1112
  %v1122 = vmul.f32 1.0, %v1121
  %v1123 = vrcp.pop %v1113
  %v1124 = vmul.f32 1.0, %v1123
  %v1125 = vrcp.pop %v1114
  %v1126 = vmul.f32 1.0, %v1125
  %v1127 = vrcp.pop %v1115
  %v1128 = vmul.f32 1.0, %v1127
  %v1129 = vrcp.pop %v1116
  %v1130 = vmul.f32 1.0, %v1129
  %v1131 = vrcp.pop %v1117
  %v1132 = vmul.f32 1.0, %v1131
  %v1133 = vrcp.pop %v1118
  %v1134 = vmul.f32 1.0, %v1133
  %1135 = vst [vmem:[%s7] sm:$0xff] %v1120
  %1136 = vst [vmem:[%s7 + $0x8] sm:$0xff] %v1122
  %1137 = vst [vmem:[%s7 + $0x10] sm:$0xff] %v1124
  %1138 = vst [vmem:[%s7 + $0x18] sm:$0xff] %v1126
  %1139 = vst [vmem:[%s7 + $0x20] sm:$0xff] %v1128
  %1140 = vst [vmem:[%s7 + $0x28] sm:$0xff] %v1130
  %1141 = vst [vmem:[%s7 + $0x30] sm:$0xff] %v1132
  %1142 = vst [vmem:[%s7 + $0x38] sm:$0xff] %v1134
  // Predicated region
  $region30: #{lstm_res_head_forward.1} parent=0 // pred_check
    _
  $region31: #{lstm_res_head_forward.1} parent=0 // pred_check_branch
    %1144 = sbr.rel (0) target = $region33
  $region32: #{lstm_res_head_forward.1} parent=0 // pred_region
    _
  $region33: #{lstm_res_head_forward.1} parent=0 // pred_fallthru
    _
  // Predicated region
  $region34: #{lstm_res_head_forward.1} parent=0 // pred_check
    _
  $region35: #{lstm_res_head_forward.1} parent=0 // pred_check_branch
    %1146 = sbr.rel (0) target = $region37
  $region36: #{lstm_res_head_forward.1} parent=0 // pred_region
    _
  $region37: #{lstm_res_head_forward.1} parent=0 // pred_fallthru
    _

</llo_original>
